<compile_context>
chip_gen: v7x
topology: tpu7x:2x2x1
jax: 0.10.0
libtpu: 0.0.40
codegen_flags: <defaults>
</compile_context>

<pallas_src>
import jax
import jax.numpy as jnp
from jax.experimental import pallas as pl
from jax.experimental.pallas import tpu as pltpu


def _spatial_attention_kernel(x_ref, w_ref, b_ref, o_ref, pad_ref):
    """Fused CBAM spatial-attention forward for one batch element.

    x_ref   : (C, H, W)       input block (batch squeezed), VMEM
    w_ref   : (98,)           7x7 conv weights, flat index [c*49 + dy*7 + dx], SMEM
    b_ref   : (1,)            conv bias, SMEM
    o_ref   : (H, W)          output block (batch & channel squeezed), VMEM
    pad_ref : (2, H+6, W+6)   VMEM scratch: zero-padded [avg, max] maps
    """
    C, H, W = x_ref.shape

    # Channel reduce (torch.mean / torch.max over dim=1): VPU adds/maxes over the
    # leading axis; (H, W) stays on (sublane, lane), no relayout.
    x = x_ref[...].astype(jnp.float32)
    avg = jnp.mean(x, axis=0)          # (H, W)
    mx = jnp.max(x, axis=0)            # (H, W)

    # In-kernel "same" padding: zero the small scratch, then overwrite the interior.
    pad_ref[...] = jnp.zeros_like(pad_ref)
    pad_ref[0, 3:3 + H, 3:3 + W] = avg
    pad_ref[1, 3:3 + H, 3:3 + W] = mx

    # 7x7 conv, 2 -> 1 channels: 98 scalar-broadcast FMAs on the VPU (the MXU would
    # be <1% utilized at these channel counts).  Static offsets, unrolled at trace
    # time; weights come from SMEM as scalars.
    acc = jnp.zeros((H, W), jnp.float32) + b_ref[0]
    for c in range(2):
        for dy in range(7):
            for dx in range(7):
                wgt = w_ref[c * 49 + dy * 7 + dx]
                acc = acc + pad_ref[c, dy:dy + H, dx:dx + W] * wgt

    # Sigmoid (exp on the EUP + divide).
    o_ref[...] = (1.0 / (1.0 + jnp.exp(-acc))).astype(o_ref.dtype)


@jax.jit
def spatial_attention_forward(x, w_conv, b_conv):
    """x: (N, C, H, W); w_conv: (1, 2, 7, 7) OIHW; b_conv: (1,). Returns (N, 1, H, W)."""
    N, C, H, W = x.shape
    w_flat = w_conv.reshape(-1).astype(jnp.float32)   # (98,) -> SMEM scalars
    b_flat = b_conv.reshape(-1).astype(jnp.float32)   # (1,)  -> SMEM scalar

    return pl.pallas_call(
        _spatial_attention_kernel,
        out_shape=jax.ShapeDtypeStruct((N, 1, H, W), x.dtype),
        grid=(N,),
        in_specs=[
            pl.BlockSpec((None, C, H, W), lambda n: (n, 0, 0, 0)),
            pl.BlockSpec(memory_space=pltpu.MemorySpace.SMEM),
            pl.BlockSpec(memory_space=pltpu.MemorySpace.SMEM),
        ],
        out_specs=pl.BlockSpec((None, None, H, W), lambda n: (n, 0, 0, 0)),
        scratch_shapes=[pltpu.VMEM((2, H + 6, W + 6), jnp.float32)],
        compiler_params=pltpu.CompilerParams(
            dimension_semantics=("parallel",)),
    )(x, w_flat, b_flat)


def _reference(x, w_conv, b_conv):
    """Pure-JAX reference mirroring the PyTorch SpatialAttentionModule."""
    avg = jnp.mean(x, axis=1, keepdims=True)
    mx = jnp.max(x, axis=1, keepdims=True)
    cat = jnp.concatenate([avg, mx], axis=1)
    y = jax.lax.conv_general_dilated(
        cat, w_conv, window_strides=(1, 1), padding=((3, 3), (3, 3)),
        dimension_numbers=("NCHW", "OIHW", "NCHW"))
    y = y + b_conv.reshape(1, -1, 1, 1)
    return 1.0 / (1.0 + jnp.exp(-y))


if __name__ == "__main__":
    N, C, H, W = 2, 4, 16, 16

    key = jax.random.PRNGKey(0)
    k_x, k_w, k_b = jax.random.split(key, 3)

    x = jax.random.normal(k_x, (N, C, H, W), jnp.float32)
    w_conv = jax.random.normal(k_w, (1, 2, 7, 7), jnp.float32) * 0.2   # Conv2d(2,1,7,padding=3) weight
    b_conv = 0.1 * jax.random.normal(k_b, (1,), jnp.float32)           # Conv2d bias

    out = spatial_attention_forward(x, w_conv, b_conv)
    jax.block_until_ready(out)

    ref = _reference(x, w_conv, b_conv)
    assert out.shape == (N, 1, H, W)
    assert jnp.allclose(out, ref, atol=1e-5, rtol=1e-5), "mismatch vs reference"

    print("KERNEL_OK")
</pallas_src>

<mosaic_0001>
module attributes {stable_mosaic.version = 11 : i64} {
  func.func @_spatial_attention_kernel(%arg0: i32, %arg1: memref<1x4x16x16xf32, #tpu.memory_space<vmem>>, %arg2: memref<98xf32, #tpu.memory_space<smem>>, %arg3: memref<1xf32, #tpu.memory_space<smem>>, %arg4: memref<1x1x16x16xf32, #tpu.memory_space<vmem>>, %arg5: memref<2x22x22xf32, #tpu.memory_space<vmem>>) attributes {dimension_semantics = [#tpu.dimension_semantics<parallel>], iteration_bounds = array<i64: 2>, scalar_prefetch = 0 : i64, scratch_operands = 1 : i64, tpu.core_type = #tpu.core_type<tc>, window_params = [{transform_indices = @transform_0, window_bounds = array<i64: 1, 4, 16, 16>}, {transform_indices = @transform_1, window_bounds = array<i64: 98>}, {transform_indices = @transform_2, window_bounds = array<i64: 1>}, {transform_indices = @transform_3, window_bounds = array<i64: 1, 1, 16, 16>}]} {
    %c0 = arith.constant 0 : index
    %c0_0 = arith.constant 0 : index
    %c0_1 = arith.constant 0 : index
    %c0_2 = arith.constant 0 : index
    %0 = vector.load %arg1[%c0, %c0_0, %c0_1, %c0_2] : memref<1x4x16x16xf32, #tpu.memory_space<vmem>>, vector<1x4x16x16xf32>
    %1 = vector.shape_cast %0 : vector<1x4x16x16xf32> to vector<4x16x16xf32>
    %cst = arith.constant dense<0.000000e+00> : vector<16x16xf32>
    %2 = vector.multi_reduction <add>, %1, %cst [0] : vector<4x16x16xf32> to vector<16x16xf32>
    %cst_3 = arith.constant 4.000000e+00 : f32
    %3 = vector.broadcast %cst_3 : f32 to vector<16x16xf32>
    %4 = arith.divf %2, %3 : vector<16x16xf32>
    %cst_4 = arith.constant dense<0xFF800000> : vector<16x16xf32>
    %5 = vector.multi_reduction <maximumf>, %1, %cst_4 [0] : vector<4x16x16xf32> to vector<16x16xf32>
    %cst_5 = arith.constant 0.000000e+00 : f32
    %6 = vector.broadcast %cst_5 : f32 to vector<2x22x22xf32>
    %c0_6 = arith.constant 0 : index
    %c0_7 = arith.constant 0 : index
    %c0_8 = arith.constant 0 : index
    %7 = vector.load %arg5[%c0_6, %c0_7, %c0_8] : memref<2x22x22xf32, #tpu.memory_space<vmem>>, vector<2x22x22xf32>
    tpu.vector_store %arg5[%c0_6, %c0_7, %c0_8], %6 {strides = array<i32>} : memref<2x22x22xf32, #tpu.memory_space<vmem>>, vector<2x22x22xf32>,
    %c0_9 = arith.constant 0 : index
    %c3 = arith.constant 3 : index
    %c3_10 = arith.constant 3 : index
    %8 = vector.load %arg5[%c0_9, %c3, %c3_10] : memref<2x22x22xf32, #tpu.memory_space<vmem>>, vector<1x16x16xf32>
    %9 = vector.shape_cast %8 : vector<1x16x16xf32> to vector<16x16xf32>
    %10 = vector.shape_cast %4 : vector<16x16xf32> to vector<1x16x16xf32>
    tpu.vector_store %arg5[%c0_9, %c3, %c3_10], %10 {strides = array<i32>} : memref<2x22x22xf32, #tpu.memory_space<vmem>>, vector<1x16x16xf32>,
    %c1 = arith.constant 1 : index
    %c3_11 = arith.constant 3 : index
    %c3_12 = arith.constant 3 : index
    %11 = vector.load %arg5[%c1, %c3_11, %c3_12] : memref<2x22x22xf32, #tpu.memory_space<vmem>>, vector<1x16x16xf32>
    %12 = vector.shape_cast %11 : vector<1x16x16xf32> to vector<16x16xf32>
    %13 = vector.shape_cast %5 : vector<16x16xf32> to vector<1x16x16xf32>
    tpu.vector_store %arg5[%c1, %c3_11, %c3_12], %13 {strides = array<i32>} : memref<2x22x22xf32, #tpu.memory_space<vmem>>, vector<1x16x16xf32>,
    %cst_13 = arith.constant 0.000000e+00 : f32
    %14 = vector.broadcast %cst_13 : f32 to vector<16x16xf32>
    %c0_14 = arith.constant 0 : index
    %15 = memref.load %arg3[%c0_14] : memref<1xf32, #tpu.memory_space<smem>>
    %16 = vector.broadcast %15 : f32 to vector<16x16xf32>
    %17 = arith.addf %14, %16 : vector<16x16xf32>
    %c0_15 = arith.constant 0 : index
    %18 = memref.load %arg2[%c0_15] : memref<98xf32, #tpu.memory_space<smem>>
    %c0_16 = arith.constant 0 : index
    %c0_17 = arith.constant 0 : index
    %c0_18 = arith.constant 0 : index
    %19 = vector.load %arg5[%c0_16, %c0_17, %c0_18] : memref<2x22x22xf32, #tpu.memory_space<vmem>>, vector<1x16x16xf32>
    %20 = vector.shape_cast %19 : vector<1x16x16xf32> to vector<16x16xf32>
    %21 = vector.broadcast %18 : f32 to vector<16x16xf32>
    %22 = arith.mulf %20, %21 : vector<16x16xf32>
    %23 = arith.addf %17, %22 : vector<16x16xf32>
    %c1_19 = arith.constant 1 : index
    %24 = memref.load %arg2[%c1_19] : memref<98xf32, #tpu.memory_space<smem>>
    %c0_20 = arith.constant 0 : index
    %c0_21 = arith.constant 0 : index
    %c1_22 = arith.constant 1 : index
    %25 = vector.load %arg5[%c0_20, %c0_21, %c1_22] : memref<2x22x22xf32, #tpu.memory_space<vmem>>, vector<1x16x16xf32>
    %26 = vector.shape_cast %25 : vector<1x16x16xf32> to vector<16x16xf32>
    %27 = vector.broadcast %24 : f32 to vector<16x16xf32>
    %28 = arith.mulf %26, %27 : vector<16x16xf32>
    %29 = arith.addf %23, %28 : vector<16x16xf32>
    %c2 = arith.constant 2 : index
    %30 = memref.load %arg2[%c2] : memref<98xf32, #tpu.memory_space<smem>>
    %c0_23 = arith.constant 0 : index
    %c0_24 = arith.constant 0 : index
    %c2_25 = arith.constant 2 : index
    %31 = vector.load %arg5[%c0_23, %c0_24, %c2_25] : memref<2x22x22xf32, #tpu.memory_space<vmem>>, vector<1x16x16xf32>
    %32 = vector.shape_cast %31 : vector<1x16x16xf32> to vector<16x16xf32>
    %33 = vector.broadcast %30 : f32 to vector<16x16xf32>
    %34 = arith.mulf %32, %33 : vector<16x16xf32>
    %35 = arith.addf %29, %34 : vector<16x16xf32>
    %c3_26 = arith.constant 3 : index
    %36 = memref.load %arg2[%c3_26] : memref<98xf32, #tpu.memory_space<smem>>
    %c0_27 = arith.constant 0 : index
    %c0_28 = arith.constant 0 : index
    %c3_29 = arith.constant 3 : index
    %37 = vector.load %arg5[%c0_27, %c0_28, %c3_29] : memref<2x22x22xf32, #tpu.memory_space<vmem>>, vector<1x16x16xf32>
    %38 = vector.shape_cast %37 : vector<1x16x16xf32> to vector<16x16xf32>
    %39 = vector.broadcast %36 : f32 to vector<16x16xf32>
    %40 = arith.mulf %38, %39 : vector<16x16xf32>
    %41 = arith.addf %35, %40 : vector<16x16xf32>
    %c4 = arith.constant 4 : index
    %42 = memref.load %arg2[%c4] : memref<98xf32, #tpu.memory_space<smem>>
    %c0_30 = arith.constant 0 : index
    %c0_31 = arith.constant 0 : index
    %c4_32 = arith.constant 4 : index
    %43 = vector.load %arg5[%c0_30, %c0_31, %c4_32] : memref<2x22x22xf32, #tpu.memory_space<vmem>>, vector<1x16x16xf32>
    %44 = vector.shape_cast %43 : vector<1x16x16xf32> to vector<16x16xf32>
    %45 = vector.broadcast %42 : f32 to vector<16x16xf32>
    %46 = arith.mulf %44, %45 : vector<16x16xf32>
    %47 = arith.addf %41, %46 : vector<16x16xf32>
    %c5 = arith.constant 5 : index
    %48 = memref.load %arg2[%c5] : memref<98xf32, #tpu.memory_space<smem>>
    %c0_33 = arith.constant 0 : index
    %c0_34 = arith.constant 0 : index
    %c5_35 = arith.constant 5 : index
    %49 = vector.load %arg5[%c0_33, %c0_34, %c5_35] : memref<2x22x22xf32, #tpu.memory_space<vmem>>, vector<1x16x16xf32>
    %50 = vector.shape_cast %49 : vector<1x16x16xf32> to vector<16x16xf32>
    %51 = vector.broadcast %48 : f32 to vector<16x16xf32>
    %52 = arith.mulf %50, %51 : vector<16x16xf32>
    %53 = arith.addf %47, %52 : vector<16x16xf32>
    %c6 = arith.constant 6 : index
    %54 = memref.load %arg2[%c6] : memref<98xf32, #tpu.memory_space<smem>>
    %c0_36 = arith.constant 0 : index
    %c0_37 = arith.constant 0 : index
    %c6_38 = arith.constant 6 : index
    %55 = vector.load %arg5[%c0_36, %c0_37, %c6_38] : memref<2x22x22xf32, #tpu.memory_space<vmem>>, vector<1x16x16xf32>
    %56 = vector.shape_cast %55 : vector<1x16x16xf32> to vector<16x16xf32>
    %57 = vector.broadcast %54 : f32 to vector<16x16xf32>
    %58 = arith.mulf %56, %57 : vector<16x16xf32>
    %59 = arith.addf %53, %58 : vector<16x16xf32>
    %c7 = arith.constant 7 : index
    %60 = memref.load %arg2[%c7] : memref<98xf32, #tpu.memory_space<smem>>
    %c0_39 = arith.constant 0 : index
    %c1_40 = arith.constant 1 : index
    %c0_41 = arith.constant 0 : index
    %61 = vector.load %arg5[%c0_39, %c1_40, %c0_41] : memref<2x22x22xf32, #tpu.memory_space<vmem>>, vector<1x16x16xf32>
    %62 = vector.shape_cast %61 : vector<1x16x16xf32> to vector<16x16xf32>
    %63 = vector.broadcast %60 : f32 to vector<16x16xf32>
    %64 = arith.mulf %62, %63 : vector<16x16xf32>
    %65 = arith.addf %59, %64 : vector<16x16xf32>
    %c8 = arith.constant 8 : index
    %66 = memref.load %arg2[%c8] : memref<98xf32, #tpu.memory_space<smem>>
    %c0_42 = arith.constant 0 : index
    %c1_43 = arith.constant 1 : index
    %c1_44 = arith.constant 1 : index
    %67 = vector.load %arg5[%c0_42, %c1_43, %c1_44] : memref<2x22x22xf32, #tpu.memory_space<vmem>>, vector<1x16x16xf32>
    %68 = vector.shape_cast %67 : vector<1x16x16xf32> to vector<16x16xf32>
    %69 = vector.broadcast %66 : f32 to vector<16x16xf32>
    %70 = arith.mulf %68, %69 : vector<16x16xf32>
    %71 = arith.addf %65, %70 : vector<16x16xf32>
    %c9 = arith.constant 9 : index
    %72 = memref.load %arg2[%c9] : memref<98xf32, #tpu.memory_space<smem>>
    %c0_45 = arith.constant 0 : index
    %c1_46 = arith.constant 1 : index
    %c2_47 = arith.constant 2 : index
    %73 = vector.load %arg5[%c0_45, %c1_46, %c2_47] : memref<2x22x22xf32, #tpu.memory_space<vmem>>, vector<1x16x16xf32>
    %74 = vector.shape_cast %73 : vector<1x16x16xf32> to vector<16x16xf32>
    %75 = vector.broadcast %72 : f32 to vector<16x16xf32>
    %76 = arith.mulf %74, %75 : vector<16x16xf32>
    %77 = arith.addf %71, %76 : vector<16x16xf32>
    %c10 = arith.constant 10 : index
    %78 = memref.load %arg2[%c10] : memref<98xf32, #tpu.memory_space<smem>>
    %c0_48 = arith.constant 0 : index
    %c1_49 = arith.constant 1 : index
    %c3_50 = arith.constant 3 : index
    %79 = vector.load %arg5[%c0_48, %c1_49, %c3_50] : memref<2x22x22xf32, #tpu.memory_space<vmem>>, vector<1x16x16xf32>
    %80 = vector.shape_cast %79 : vector<1x16x16xf32> to vector<16x16xf32>
    %81 = vector.broadcast %78 : f32 to vector<16x16xf32>
    %82 = arith.mulf %80, %81 : vector<16x16xf32>
    %83 = arith.addf %77, %82 : vector<16x16xf32>
    %c11 = arith.constant 11 : index
    %84 = memref.load %arg2[%c11] : memref<98xf32, #tpu.memory_space<smem>>
    %c0_51 = arith.constant 0 : index
    %c1_52 = arith.constant 1 : index
    %c4_53 = arith.constant 4 : index
    %85 = vector.load %arg5[%c0_51, %c1_52, %c4_53] : memref<2x22x22xf32, #tpu.memory_space<vmem>>, vector<1x16x16xf32>
    %86 = vector.shape_cast %85 : vector<1x16x16xf32> to vector<16x16xf32>
    %87 = vector.broadcast %84 : f32 to vector<16x16xf32>
    %88 = arith.mulf %86, %87 : vector<16x16xf32>
    %89 = arith.addf %83, %88 : vector<16x16xf32>
    %c12 = arith.constant 12 : index
    %90 = memref.load %arg2[%c12] : memref<98xf32, #tpu.memory_space<smem>>
    %c0_54 = arith.constant 0 : index
    %c1_55 = arith.constant 1 : index
    %c5_56 = arith.constant 5 : index
    %91 = vector.load %arg5[%c0_54, %c1_55, %c5_56] : memref<2x22x22xf32, #tpu.memory_space<vmem>>, vector<1x16x16xf32>
    %92 = vector.shape_cast %91 : vector<1x16x16xf32> to vector<16x16xf32>
    %93 = vector.broadcast %90 : f32 to vector<16x16xf32>
    %94 = arith.mulf %92, %93 : vector<16x16xf32>
    %95 = arith.addf %89, %94 : vector<16x16xf32>
    %c13 = arith.constant 13 : index
    %96 = memref.load %arg2[%c13] : memref<98xf32, #tpu.memory_space<smem>>
    %c0_57 = arith.constant 0 : index
    %c1_58 = arith.constant 1 : index
    %c6_59 = arith.constant 6 : index
    %97 = vector.load %arg5[%c0_57, %c1_58, %c6_59] : memref<2x22x22xf32, #tpu.memory_space<vmem>>, vector<1x16x16xf32>
    %98 = vector.shape_cast %97 : vector<1x16x16xf32> to vector<16x16xf32>
    %99 = vector.broadcast %96 : f32 to vector<16x16xf32>
    %100 = arith.mulf %98, %99 : vector<16x16xf32>
    %101 = arith.addf %95, %100 : vector<16x16xf32>
    %c14 = arith.constant 14 : index
    %102 = memref.load %arg2[%c14] : memref<98xf32, #tpu.memory_space<smem>>
    %c0_60 = arith.constant 0 : index
    %c2_61 = arith.constant 2 : index
    %c0_62 = arith.constant 0 : index
    %103 = vector.load %arg5[%c0_60, %c2_61, %c0_62] : memref<2x22x22xf32, #tpu.memory_space<vmem>>, vector<1x16x16xf32>
    %104 = vector.shape_cast %103 : vector<1x16x16xf32> to vector<16x16xf32>
    %105 = vector.broadcast %102 : f32 to vector<16x16xf32>
    %106 = arith.mulf %104, %105 : vector<16x16xf32>
    %107 = arith.addf %101, %106 : vector<16x16xf32>
    %c15 = arith.constant 15 : index
    %108 = memref.load %arg2[%c15] : memref<98xf32, #tpu.memory_space<smem>>
    %c0_63 = arith.constant 0 : index
    %c2_64 = arith.constant 2 : index
    %c1_65 = arith.constant 1 : index
    %109 = vector.load %arg5[%c0_63, %c2_64, %c1_65] : memref<2x22x22xf32, #tpu.memory_space<vmem>>, vector<1x16x16xf32>
    %110 = vector.shape_cast %109 : vector<1x16x16xf32> to vector<16x16xf32>
    %111 = vector.broadcast %108 : f32 to vector<16x16xf32>
    %112 = arith.mulf %110, %111 : vector<16x16xf32>
    %113 = arith.addf %107, %112 : vector<16x16xf32>
    %c16 = arith.constant 16 : index
    %114 = memref.load %arg2[%c16] : memref<98xf32, #tpu.memory_space<smem>>
    %c0_66 = arith.constant 0 : index
    %c2_67 = arith.constant 2 : index
    %c2_68 = arith.constant 2 : index
    %115 = vector.load %arg5[%c0_66, %c2_67, %c2_68] : memref<2x22x22xf32, #tpu.memory_space<vmem>>, vector<1x16x16xf32>
    %116 = vector.shape_cast %115 : vector<1x16x16xf32> to vector<16x16xf32>
    %117 = vector.broadcast %114 : f32 to vector<16x16xf32>
    %118 = arith.mulf %116, %117 : vector<16x16xf32>
    %119 = arith.addf %113, %118 : vector<16x16xf32>
    %c17 = arith.constant 17 : index
    %120 = memref.load %arg2[%c17] : memref<98xf32, #tpu.memory_space<smem>>
    %c0_69 = arith.constant 0 : index
    %c2_70 = arith.constant 2 : index
    %c3_71 = arith.constant 3 : index
    %121 = vector.load %arg5[%c0_69, %c2_70, %c3_71] : memref<2x22x22xf32, #tpu.memory_space<vmem>>, vector<1x16x16xf32>
    %122 = vector.shape_cast %121 : vector<1x16x16xf32> to vector<16x16xf32>
    %123 = vector.broadcast %120 : f32 to vector<16x16xf32>
    %124 = arith.mulf %122, %123 : vector<16x16xf32>
    %125 = arith.addf %119, %124 : vector<16x16xf32>
    %c18 = arith.constant 18 : index
    %126 = memref.load %arg2[%c18] : memref<98xf32, #tpu.memory_space<smem>>
    %c0_72 = arith.constant 0 : index
    %c2_73 = arith.constant 2 : index
    %c4_74 = arith.constant 4 : index
    %127 = vector.load %arg5[%c0_72, %c2_73, %c4_74] : memref<2x22x22xf32, #tpu.memory_space<vmem>>, vector<1x16x16xf32>
    %128 = vector.shape_cast %127 : vector<1x16x16xf32> to vector<16x16xf32>
    %129 = vector.broadcast %126 : f32 to vector<16x16xf32>
    %130 = arith.mulf %128, %129 : vector<16x16xf32>
    %131 = arith.addf %125, %130 : vector<16x16xf32>
    %c19 = arith.constant 19 : index
    %132 = memref.load %arg2[%c19] : memref<98xf32, #tpu.memory_space<smem>>
    %c0_75 = arith.constant 0 : index
    %c2_76 = arith.constant 2 : index
    %c5_77 = arith.constant 5 : index
    %133 = vector.load %arg5[%c0_75, %c2_76, %c5_77] : memref<2x22x22xf32, #tpu.memory_space<vmem>>, vector<1x16x16xf32>
    %134 = vector.shape_cast %133 : vector<1x16x16xf32> to vector<16x16xf32>
    %135 = vector.broadcast %132 : f32 to vector<16x16xf32>
    %136 = arith.mulf %134, %135 : vector<16x16xf32>
    %137 = arith.addf %131, %136 : vector<16x16xf32>
    %c20 = arith.constant 20 : index
    %138 = memref.load %arg2[%c20] : memref<98xf32, #tpu.memory_space<smem>>
    %c0_78 = arith.constant 0 : index
    %c2_79 = arith.constant 2 : index
    %c6_80 = arith.constant 6 : index
    %139 = vector.load %arg5[%c0_78, %c2_79, %c6_80] : memref<2x22x22xf32, #tpu.memory_space<vmem>>, vector<1x16x16xf32>
    %140 = vector.shape_cast %139 : vector<1x16x16xf32> to vector<16x16xf32>
    %141 = vector.broadcast %138 : f32 to vector<16x16xf32>
    %142 = arith.mulf %140, %141 : vector<16x16xf32>
    %143 = arith.addf %137, %142 : vector<16x16xf32>
    %c21 = arith.constant 21 : index
    %144 = memref.load %arg2[%c21] : memref<98xf32, #tpu.memory_space<smem>>
    %c0_81 = arith.constant 0 : index
    %c3_82 = arith.constant 3 : index
    %c0_83 = arith.constant 0 : index
    %145 = vector.load %arg5[%c0_81, %c3_82, %c0_83] : memref<2x22x22xf32, #tpu.memory_space<vmem>>, vector<1x16x16xf32>
    %146 = vector.shape_cast %145 : vector<1x16x16xf32> to vector<16x16xf32>
    %147 = vector.broadcast %144 : f32 to vector<16x16xf32>
    %148 = arith.mulf %146, %147 : vector<16x16xf32>
    %149 = arith.addf %143, %148 : vector<16x16xf32>
    %c22 = arith.constant 22 : index
    %150 = memref.load %arg2[%c22] : memref<98xf32, #tpu.memory_space<smem>>
    %c0_84 = arith.constant 0 : index
    %c3_85 = arith.constant 3 : index
    %c1_86 = arith.constant 1 : index
    %151 = vector.load %arg5[%c0_84, %c3_85, %c1_86] : memref<2x22x22xf32, #tpu.memory_space<vmem>>, vector<1x16x16xf32>
    %152 = vector.shape_cast %151 : vector<1x16x16xf32> to vector<16x16xf32>
    %153 = vector.broadcast %150 : f32 to vector<16x16xf32>
    %154 = arith.mulf %152, %153 : vector<16x16xf32>
    %155 = arith.addf %149, %154 : vector<16x16xf32>
    %c23 = arith.constant 23 : index
    %156 = memref.load %arg2[%c23] : memref<98xf32, #tpu.memory_space<smem>>
    %c0_87 = arith.constant 0 : index
    %c3_88 = arith.constant 3 : index
    %c2_89 = arith.constant 2 : index
    %157 = vector.load %arg5[%c0_87, %c3_88, %c2_89] : memref<2x22x22xf32, #tpu.memory_space<vmem>>, vector<1x16x16xf32>
    %158 = vector.shape_cast %157 : vector<1x16x16xf32> to vector<16x16xf32>
    %159 = vector.broadcast %156 : f32 to vector<16x16xf32>
    %160 = arith.mulf %158, %159 : vector<16x16xf32>
    %161 = arith.addf %155, %160 : vector<16x16xf32>
    %c24 = arith.constant 24 : index
    %162 = memref.load %arg2[%c24] : memref<98xf32, #tpu.memory_space<smem>>
    %c0_90 = arith.constant 0 : index
    %c3_91 = arith.constant 3 : index
    %c3_92 = arith.constant 3 : index
    %163 = vector.load %arg5[%c0_90, %c3_91, %c3_92] : memref<2x22x22xf32, #tpu.memory_space<vmem>>, vector<1x16x16xf32>
    %164 = vector.shape_cast %163 : vector<1x16x16xf32> to vector<16x16xf32>
    %165 = vector.broadcast %162 : f32 to vector<16x16xf32>
    %166 = arith.mulf %164, %165 : vector<16x16xf32>
    %167 = arith.addf %161, %166 : vector<16x16xf32>
    %c25 = arith.constant 25 : index
    %168 = memref.load %arg2[%c25] : memref<98xf32, #tpu.memory_space<smem>>
    %c0_93 = arith.constant 0 : index
    %c3_94 = arith.constant 3 : index
    %c4_95 = arith.constant 4 : index
    %169 = vector.load %arg5[%c0_93, %c3_94, %c4_95] : memref<2x22x22xf32, #tpu.memory_space<vmem>>, vector<1x16x16xf32>
    %170 = vector.shape_cast %169 : vector<1x16x16xf32> to vector<16x16xf32>
    %171 = vector.broadcast %168 : f32 to vector<16x16xf32>
    %172 = arith.mulf %170, %171 : vector<16x16xf32>
    %173 = arith.addf %167, %172 : vector<16x16xf32>
    %c26 = arith.constant 26 : index
    %174 = memref.load %arg2[%c26] : memref<98xf32, #tpu.memory_space<smem>>
    %c0_96 = arith.constant 0 : index
    %c3_97 = arith.constant 3 : index
    %c5_98 = arith.constant 5 : index
    %175 = vector.load %arg5[%c0_96, %c3_97, %c5_98] : memref<2x22x22xf32, #tpu.memory_space<vmem>>, vector<1x16x16xf32>
    %176 = vector.shape_cast %175 : vector<1x16x16xf32> to vector<16x16xf32>
    %177 = vector.broadcast %174 : f32 to vector<16x16xf32>
    %178 = arith.mulf %176, %177 : vector<16x16xf32>
    %179 = arith.addf %173, %178 : vector<16x16xf32>
    %c27 = arith.constant 27 : index
    %180 = memref.load %arg2[%c27] : memref<98xf32, #tpu.memory_space<smem>>
    %c0_99 = arith.constant 0 : index
    %c3_100 = arith.constant 3 : index
    %c6_101 = arith.constant 6 : index
    %181 = vector.load %arg5[%c0_99, %c3_100, %c6_101] : memref<2x22x22xf32, #tpu.memory_space<vmem>>, vector<1x16x16xf32>
    %182 = vector.shape_cast %181 : vector<1x16x16xf32> to vector<16x16xf32>
    %183 = vector.broadcast %180 : f32 to vector<16x16xf32>
    %184 = arith.mulf %182, %183 : vector<16x16xf32>
    %185 = arith.addf %179, %184 : vector<16x16xf32>
    %c28 = arith.constant 28 : index
    %186 = memref.load %arg2[%c28] : memref<98xf32, #tpu.memory_space<smem>>
    %c0_102 = arith.constant 0 : index
    %c4_103 = arith.constant 4 : index
    %c0_104 = arith.constant 0 : index
    %187 = vector.load %arg5[%c0_102, %c4_103, %c0_104] : memref<2x22x22xf32, #tpu.memory_space<vmem>>, vector<1x16x16xf32>
    %188 = vector.shape_cast %187 : vector<1x16x16xf32> to vector<16x16xf32>
    %189 = vector.broadcast %186 : f32 to vector<16x16xf32>
    %190 = arith.mulf %188, %189 : vector<16x16xf32>
    %191 = arith.addf %185, %190 : vector<16x16xf32>
    %c29 = arith.constant 29 : index
    %192 = memref.load %arg2[%c29] : memref<98xf32, #tpu.memory_space<smem>>
    %c0_105 = arith.constant 0 : index
    %c4_106 = arith.constant 4 : index
    %c1_107 = arith.constant 1 : index
    %193 = vector.load %arg5[%c0_105, %c4_106, %c1_107] : memref<2x22x22xf32, #tpu.memory_space<vmem>>, vector<1x16x16xf32>
    %194 = vector.shape_cast %193 : vector<1x16x16xf32> to vector<16x16xf32>
    %195 = vector.broadcast %192 : f32 to vector<16x16xf32>
    %196 = arith.mulf %194, %195 : vector<16x16xf32>
    %197 = arith.addf %191, %196 : vector<16x16xf32>
    %c30 = arith.constant 30 : index
    %198 = memref.load %arg2[%c30] : memref<98xf32, #tpu.memory_space<smem>>
    %c0_108 = arith.constant 0 : index
    %c4_109 = arith.constant 4 : index
    %c2_110 = arith.constant 2 : index
    %199 = vector.load %arg5[%c0_108, %c4_109, %c2_110] : memref<2x22x22xf32, #tpu.memory_space<vmem>>, vector<1x16x16xf32>
    %200 = vector.shape_cast %199 : vector<1x16x16xf32> to vector<16x16xf32>
    %201 = vector.broadcast %198 : f32 to vector<16x16xf32>
    %202 = arith.mulf %200, %201 : vector<16x16xf32>
    %203 = arith.addf %197, %202 : vector<16x16xf32>
    %c31 = arith.constant 31 : index
    %204 = memref.load %arg2[%c31] : memref<98xf32, #tpu.memory_space<smem>>
    %c0_111 = arith.constant 0 : index
    %c4_112 = arith.constant 4 : index
    %c3_113 = arith.constant 3 : index
    %205 = vector.load %arg5[%c0_111, %c4_112, %c3_113] : memref<2x22x22xf32, #tpu.memory_space<vmem>>, vector<1x16x16xf32>
    %206 = vector.shape_cast %205 : vector<1x16x16xf32> to vector<16x16xf32>
    %207 = vector.broadcast %204 : f32 to vector<16x16xf32>
    %208 = arith.mulf %206, %207 : vector<16x16xf32>
    %209 = arith.addf %203, %208 : vector<16x16xf32>
    %c32 = arith.constant 32 : index
    %210 = memref.load %arg2[%c32] : memref<98xf32, #tpu.memory_space<smem>>
    %c0_114 = arith.constant 0 : index
    %c4_115 = arith.constant 4 : index
    %c4_116 = arith.constant 4 : index
    %211 = vector.load %arg5[%c0_114, %c4_115, %c4_116] : memref<2x22x22xf32, #tpu.memory_space<vmem>>, vector<1x16x16xf32>
    %212 = vector.shape_cast %211 : vector<1x16x16xf32> to vector<16x16xf32>
    %213 = vector.broadcast %210 : f32 to vector<16x16xf32>
    %214 = arith.mulf %212, %213 : vector<16x16xf32>
    %215 = arith.addf %209, %214 : vector<16x16xf32>
    %c33 = arith.constant 33 : index
    %216 = memref.load %arg2[%c33] : memref<98xf32, #tpu.memory_space<smem>>
    %c0_117 = arith.constant 0 : index
    %c4_118 = arith.constant 4 : index
    %c5_119 = arith.constant 5 : index
    %217 = vector.load %arg5[%c0_117, %c4_118, %c5_119] : memref<2x22x22xf32, #tpu.memory_space<vmem>>, vector<1x16x16xf32>
    %218 = vector.shape_cast %217 : vector<1x16x16xf32> to vector<16x16xf32>
    %219 = vector.broadcast %216 : f32 to vector<16x16xf32>
    %220 = arith.mulf %218, %219 : vector<16x16xf32>
    %221 = arith.addf %215, %220 : vector<16x16xf32>
    %c34 = arith.constant 34 : index
    %222 = memref.load %arg2[%c34] : memref<98xf32, #tpu.memory_space<smem>>
    %c0_120 = arith.constant 0 : index
    %c4_121 = arith.constant 4 : index
    %c6_122 = arith.constant 6 : index
    %223 = vector.load %arg5[%c0_120, %c4_121, %c6_122] : memref<2x22x22xf32, #tpu.memory_space<vmem>>, vector<1x16x16xf32>
    %224 = vector.shape_cast %223 : vector<1x16x16xf32> to vector<16x16xf32>
    %225 = vector.broadcast %222 : f32 to vector<16x16xf32>
    %226 = arith.mulf %224, %225 : vector<16x16xf32>
    %227 = arith.addf %221, %226 : vector<16x16xf32>
    %c35 = arith.constant 35 : index
    %228 = memref.load %arg2[%c35] : memref<98xf32, #tpu.memory_space<smem>>
    %c0_123 = arith.constant 0 : index
    %c5_124 = arith.constant 5 : index
    %c0_125 = arith.constant 0 : index
    %229 = vector.load %arg5[%c0_123, %c5_124, %c0_125] : memref<2x22x22xf32, #tpu.memory_space<vmem>>, vector<1x16x16xf32>
    %230 = vector.shape_cast %229 : vector<1x16x16xf32> to vector<16x16xf32>
    %231 = vector.broadcast %228 : f32 to vector<16x16xf32>
    %232 = arith.mulf %230, %231 : vector<16x16xf32>
    %233 = arith.addf %227, %232 : vector<16x16xf32>
    %c36 = arith.constant 36 : index
    %234 = memref.load %arg2[%c36] : memref<98xf32, #tpu.memory_space<smem>>
    %c0_126 = arith.constant 0 : index
    %c5_127 = arith.constant 5 : index
    %c1_128 = arith.constant 1 : index
    %235 = vector.load %arg5[%c0_126, %c5_127, %c1_128] : memref<2x22x22xf32, #tpu.memory_space<vmem>>, vector<1x16x16xf32>
    %236 = vector.shape_cast %235 : vector<1x16x16xf32> to vector<16x16xf32>
    %237 = vector.broadcast %234 : f32 to vector<16x16xf32>
    %238 = arith.mulf %236, %237 : vector<16x16xf32>
    %239 = arith.addf %233, %238 : vector<16x16xf32>
    %c37 = arith.constant 37 : index
    %240 = memref.load %arg2[%c37] : memref<98xf32, #tpu.memory_space<smem>>
    %c0_129 = arith.constant 0 : index
    %c5_130 = arith.constant 5 : index
    %c2_131 = arith.constant 2 : index
    %241 = vector.load %arg5[%c0_129, %c5_130, %c2_131] : memref<2x22x22xf32, #tpu.memory_space<vmem>>, vector<1x16x16xf32>
    %242 = vector.shape_cast %241 : vector<1x16x16xf32> to vector<16x16xf32>
    %243 = vector.broadcast %240 : f32 to vector<16x16xf32>
    %244 = arith.mulf %242, %243 : vector<16x16xf32>
    %245 = arith.addf %239, %244 : vector<16x16xf32>
    %c38 = arith.constant 38 : index
    %246 = memref.load %arg2[%c38] : memref<98xf32, #tpu.memory_space<smem>>
    %c0_132 = arith.constant 0 : index
    %c5_133 = arith.constant 5 : index
    %c3_134 = arith.constant 3 : index
    %247 = vector.load %arg5[%c0_132, %c5_133, %c3_134] : memref<2x22x22xf32, #tpu.memory_space<vmem>>, vector<1x16x16xf32>
    %248 = vector.shape_cast %247 : vector<1x16x16xf32> to vector<16x16xf32>
    %249 = vector.broadcast %246 : f32 to vector<16x16xf32>
    %250 = arith.mulf %248, %249 : vector<16x16xf32>
    %251 = arith.addf %245, %250 : vector<16x16xf32>
    %c39 = arith.constant 39 : index
    %252 = memref.load %arg2[%c39] : memref<98xf32, #tpu.memory_space<smem>>
    %c0_135 = arith.constant 0 : index
    %c5_136 = arith.constant 5 : index
    %c4_137 = arith.constant 4 : index
    %253 = vector.load %arg5[%c0_135, %c5_136, %c4_137] : memref<2x22x22xf32, #tpu.memory_space<vmem>>, vector<1x16x16xf32>
    %254 = vector.shape_cast %253 : vector<1x16x16xf32> to vector<16x16xf32>
    %255 = vector.broadcast %252 : f32 to vector<16x16xf32>
    %256 = arith.mulf %254, %255 : vector<16x16xf32>
    %257 = arith.addf %251, %256 : vector<16x16xf32>
    %c40 = arith.constant 40 : index
    %258 = memref.load %arg2[%c40] : memref<98xf32, #tpu.memory_space<smem>>
    %c0_138 = arith.constant 0 : index
    %c5_139 = arith.constant 5 : index
    %c5_140 = arith.constant 5 : index
    %259 = vector.load %arg5[%c0_138, %c5_139, %c5_140] : memref<2x22x22xf32, #tpu.memory_space<vmem>>, vector<1x16x16xf32>
    %260 = vector.shape_cast %259 : vector<1x16x16xf32> to vector<16x16xf32>
    %261 = vector.broadcast %258 : f32 to vector<16x16xf32>
    %262 = arith.mulf %260, %261 : vector<16x16xf32>
    %263 = arith.addf %257, %262 : vector<16x16xf32>
    %c41 = arith.constant 41 : index
    %264 = memref.load %arg2[%c41] : memref<98xf32, #tpu.memory_space<smem>>
    %c0_141 = arith.constant 0 : index
    %c5_142 = arith.constant 5 : index
    %c6_143 = arith.constant 6 : index
    %265 = vector.load %arg5[%c0_141, %c5_142, %c6_143] : memref<2x22x22xf32, #tpu.memory_space<vmem>>, vector<1x16x16xf32>
    %266 = vector.shape_cast %265 : vector<1x16x16xf32> to vector<16x16xf32>
    %267 = vector.broadcast %264 : f32 to vector<16x16xf32>
    %268 = arith.mulf %266, %267 : vector<16x16xf32>
    %269 = arith.addf %263, %268 : vector<16x16xf32>
    %c42 = arith.constant 42 : index
    %270 = memref.load %arg2[%c42] : memref<98xf32, #tpu.memory_space<smem>>
    %c0_144 = arith.constant 0 : index
    %c6_145 = arith.constant 6 : index
    %c0_146 = arith.constant 0 : index
    %271 = vector.load %arg5[%c0_144, %c6_145, %c0_146] : memref<2x22x22xf32, #tpu.memory_space<vmem>>, vector<1x16x16xf32>
    %272 = vector.shape_cast %271 : vector<1x16x16xf32> to vector<16x16xf32>
    %273 = vector.broadcast %270 : f32 to vector<16x16xf32>
    %274 = arith.mulf %272, %273 : vector<16x16xf32>
    %275 = arith.addf %269, %274 : vector<16x16xf32>
    %c43 = arith.constant 43 : index
    %276 = memref.load %arg2[%c43] : memref<98xf32, #tpu.memory_space<smem>>
    %c0_147 = arith.constant 0 : index
    %c6_148 = arith.constant 6 : index
    %c1_149 = arith.constant 1 : index
    %277 = vector.load %arg5[%c0_147, %c6_148, %c1_149] : memref<2x22x22xf32, #tpu.memory_space<vmem>>, vector<1x16x16xf32>
    %278 = vector.shape_cast %277 : vector<1x16x16xf32> to vector<16x16xf32>
    %279 = vector.broadcast %276 : f32 to vector<16x16xf32>
    %280 = arith.mulf %278, %279 : vector<16x16xf32>
    %281 = arith.addf %275, %280 : vector<16x16xf32>
    %c44 = arith.constant 44 : index
    %282 = memref.load %arg2[%c44] : memref<98xf32, #tpu.memory_space<smem>>
    %c0_150 = arith.constant 0 : index
    %c6_151 = arith.constant 6 : index
    %c2_152 = arith.constant 2 : index
    %283 = vector.load %arg5[%c0_150, %c6_151, %c2_152] : memref<2x22x22xf32, #tpu.memory_space<vmem>>, vector<1x16x16xf32>
    %284 = vector.shape_cast %283 : vector<1x16x16xf32> to vector<16x16xf32>
    %285 = vector.broadcast %282 : f32 to vector<16x16xf32>
    %286 = arith.mulf %284, %285 : vector<16x16xf32>
    %287 = arith.addf %281, %286 : vector<16x16xf32>
    %c45 = arith.constant 45 : index
    %288 = memref.load %arg2[%c45] : memref<98xf32, #tpu.memory_space<smem>>
    %c0_153 = arith.constant 0 : index
    %c6_154 = arith.constant 6 : index
    %c3_155 = arith.constant 3 : index
    %289 = vector.load %arg5[%c0_153, %c6_154, %c3_155] : memref<2x22x22xf32, #tpu.memory_space<vmem>>, vector<1x16x16xf32>
    %290 = vector.shape_cast %289 : vector<1x16x16xf32> to vector<16x16xf32>
    %291 = vector.broadcast %288 : f32 to vector<16x16xf32>
    %292 = arith.mulf %290, %291 : vector<16x16xf32>
    %293 = arith.addf %287, %292 : vector<16x16xf32>
    %c46 = arith.constant 46 : index
    %294 = memref.load %arg2[%c46] : memref<98xf32, #tpu.memory_space<smem>>
    %c0_156 = arith.constant 0 : index
    %c6_157 = arith.constant 6 : index
    %c4_158 = arith.constant 4 : index
    %295 = vector.load %arg5[%c0_156, %c6_157, %c4_158] : memref<2x22x22xf32, #tpu.memory_space<vmem>>, vector<1x16x16xf32>
    %296 = vector.shape_cast %295 : vector<1x16x16xf32> to vector<16x16xf32>
    %297 = vector.broadcast %294 : f32 to vector<16x16xf32>
    %298 = arith.mulf %296, %297 : vector<16x16xf32>
    %299 = arith.addf %293, %298 : vector<16x16xf32>
    %c47 = arith.constant 47 : index
    %300 = memref.load %arg2[%c47] : memref<98xf32, #tpu.memory_space<smem>>
    %c0_159 = arith.constant 0 : index
    %c6_160 = arith.constant 6 : index
    %c5_161 = arith.constant 5 : index
    %301 = vector.load %arg5[%c0_159, %c6_160, %c5_161] : memref<2x22x22xf32, #tpu.memory_space<vmem>>, vector<1x16x16xf32>
    %302 = vector.shape_cast %301 : vector<1x16x16xf32> to vector<16x16xf32>
    %303 = vector.broadcast %300 : f32 to vector<16x16xf32>
    %304 = arith.mulf %302, %303 : vector<16x16xf32>
    %305 = arith.addf %299, %304 : vector<16x16xf32>
    %c48 = arith.constant 48 : index
    %306 = memref.load %arg2[%c48] : memref<98xf32, #tpu.memory_space<smem>>
    %c0_162 = arith.constant 0 : index
    %c6_163 = arith.constant 6 : index
    %c6_164 = arith.constant 6 : index
    %307 = vector.load %arg5[%c0_162, %c6_163, %c6_164] : memref<2x22x22xf32, #tpu.memory_space<vmem>>, vector<1x16x16xf32>
    %308 = vector.shape_cast %307 : vector<1x16x16xf32> to vector<16x16xf32>
    %309 = vector.broadcast %306 : f32 to vector<16x16xf32>
    %310 = arith.mulf %308, %309 : vector<16x16xf32>
    %311 = arith.addf %305, %310 : vector<16x16xf32>
    %c49 = arith.constant 49 : index
    %312 = memref.load %arg2[%c49] : memref<98xf32, #tpu.memory_space<smem>>
    %c1_165 = arith.constant 1 : index
    %c0_166 = arith.constant 0 : index
    %c0_167 = arith.constant 0 : index
    %313 = vector.load %arg5[%c1_165, %c0_166, %c0_167] : memref<2x22x22xf32, #tpu.memory_space<vmem>>, vector<1x16x16xf32>
    %314 = vector.shape_cast %313 : vector<1x16x16xf32> to vector<16x16xf32>
    %315 = vector.broadcast %312 : f32 to vector<16x16xf32>
    %316 = arith.mulf %314, %315 : vector<16x16xf32>
    %317 = arith.addf %311, %316 : vector<16x16xf32>
    %c50 = arith.constant 50 : index
    %318 = memref.load %arg2[%c50] : memref<98xf32, #tpu.memory_space<smem>>
    %c1_168 = arith.constant 1 : index
    %c0_169 = arith.constant 0 : index
    %c1_170 = arith.constant 1 : index
    %319 = vector.load %arg5[%c1_168, %c0_169, %c1_170] : memref<2x22x22xf32, #tpu.memory_space<vmem>>, vector<1x16x16xf32>
    %320 = vector.shape_cast %319 : vector<1x16x16xf32> to vector<16x16xf32>
    %321 = vector.broadcast %318 : f32 to vector<16x16xf32>
    %322 = arith.mulf %320, %321 : vector<16x16xf32>
    %323 = arith.addf %317, %322 : vector<16x16xf32>
    %c51 = arith.constant 51 : index
    %324 = memref.load %arg2[%c51] : memref<98xf32, #tpu.memory_space<smem>>
    %c1_171 = arith.constant 1 : index
    %c0_172 = arith.constant 0 : index
    %c2_173 = arith.constant 2 : index
    %325 = vector.load %arg5[%c1_171, %c0_172, %c2_173] : memref<2x22x22xf32, #tpu.memory_space<vmem>>, vector<1x16x16xf32>
    %326 = vector.shape_cast %325 : vector<1x16x16xf32> to vector<16x16xf32>
    %327 = vector.broadcast %324 : f32 to vector<16x16xf32>
    %328 = arith.mulf %326, %327 : vector<16x16xf32>
    %329 = arith.addf %323, %328 : vector<16x16xf32>
    %c52 = arith.constant 52 : index
    %330 = memref.load %arg2[%c52] : memref<98xf32, #tpu.memory_space<smem>>
    %c1_174 = arith.constant 1 : index
    %c0_175 = arith.constant 0 : index
    %c3_176 = arith.constant 3 : index
    %331 = vector.load %arg5[%c1_174, %c0_175, %c3_176] : memref<2x22x22xf32, #tpu.memory_space<vmem>>, vector<1x16x16xf32>
    %332 = vector.shape_cast %331 : vector<1x16x16xf32> to vector<16x16xf32>
    %333 = vector.broadcast %330 : f32 to vector<16x16xf32>
    %334 = arith.mulf %332, %333 : vector<16x16xf32>
    %335 = arith.addf %329, %334 : vector<16x16xf32>
    %c53 = arith.constant 53 : index
    %336 = memref.load %arg2[%c53] : memref<98xf32, #tpu.memory_space<smem>>
    %c1_177 = arith.constant 1 : index
    %c0_178 = arith.constant 0 : index
    %c4_179 = arith.constant 4 : index
    %337 = vector.load %arg5[%c1_177, %c0_178, %c4_179] : memref<2x22x22xf32, #tpu.memory_space<vmem>>, vector<1x16x16xf32>
    %338 = vector.shape_cast %337 : vector<1x16x16xf32> to vector<16x16xf32>
    %339 = vector.broadcast %336 : f32 to vector<16x16xf32>
    %340 = arith.mulf %338, %339 : vector<16x16xf32>
    %341 = arith.addf %335, %340 : vector<16x16xf32>
    %c54 = arith.constant 54 : index
    %342 = memref.load %arg2[%c54] : memref<98xf32, #tpu.memory_space<smem>>
    %c1_180 = arith.constant 1 : index
    %c0_181 = arith.constant 0 : index
    %c5_182 = arith.constant 5 : index
    %343 = vector.load %arg5[%c1_180, %c0_181, %c5_182] : memref<2x22x22xf32, #tpu.memory_space<vmem>>, vector<1x16x16xf32>
    %344 = vector.shape_cast %343 : vector<1x16x16xf32> to vector<16x16xf32>
    %345 = vector.broadcast %342 : f32 to vector<16x16xf32>
    %346 = arith.mulf %344, %345 : vector<16x16xf32>
    %347 = arith.addf %341, %346 : vector<16x16xf32>
    %c55 = arith.constant 55 : index
    %348 = memref.load %arg2[%c55] : memref<98xf32, #tpu.memory_space<smem>>
    %c1_183 = arith.constant 1 : index
    %c0_184 = arith.constant 0 : index
    %c6_185 = arith.constant 6 : index
    %349 = vector.load %arg5[%c1_183, %c0_184, %c6_185] : memref<2x22x22xf32, #tpu.memory_space<vmem>>, vector<1x16x16xf32>
    %350 = vector.shape_cast %349 : vector<1x16x16xf32> to vector<16x16xf32>
    %351 = vector.broadcast %348 : f32 to vector<16x16xf32>
    %352 = arith.mulf %350, %351 : vector<16x16xf32>
    %353 = arith.addf %347, %352 : vector<16x16xf32>
    %c56 = arith.constant 56 : index
    %354 = memref.load %arg2[%c56] : memref<98xf32, #tpu.memory_space<smem>>
    %c1_186 = arith.constant 1 : index
    %c1_187 = arith.constant 1 : index
    %c0_188 = arith.constant 0 : index
    %355 = vector.load %arg5[%c1_186, %c1_187, %c0_188] : memref<2x22x22xf32, #tpu.memory_space<vmem>>, vector<1x16x16xf32>
    %356 = vector.shape_cast %355 : vector<1x16x16xf32> to vector<16x16xf32>
    %357 = vector.broadcast %354 : f32 to vector<16x16xf32>
    %358 = arith.mulf %356, %357 : vector<16x16xf32>
    %359 = arith.addf %353, %358 : vector<16x16xf32>
    %c57 = arith.constant 57 : index
    %360 = memref.load %arg2[%c57] : memref<98xf32, #tpu.memory_space<smem>>
    %c1_189 = arith.constant 1 : index
    %c1_190 = arith.constant 1 : index
    %c1_191 = arith.constant 1 : index
    %361 = vector.load %arg5[%c1_189, %c1_190, %c1_191] : memref<2x22x22xf32, #tpu.memory_space<vmem>>, vector<1x16x16xf32>
    %362 = vector.shape_cast %361 : vector<1x16x16xf32> to vector<16x16xf32>
    %363 = vector.broadcast %360 : f32 to vector<16x16xf32>
    %364 = arith.mulf %362, %363 : vector<16x16xf32>
    %365 = arith.addf %359, %364 : vector<16x16xf32>
    %c58 = arith.constant 58 : index
    %366 = memref.load %arg2[%c58] : memref<98xf32, #tpu.memory_space<smem>>
    %c1_192 = arith.constant 1 : index
    %c1_193 = arith.constant 1 : index
    %c2_194 = arith.constant 2 : index
    %367 = vector.load %arg5[%c1_192, %c1_193, %c2_194] : memref<2x22x22xf32, #tpu.memory_space<vmem>>, vector<1x16x16xf32>
    %368 = vector.shape_cast %367 : vector<1x16x16xf32> to vector<16x16xf32>
    %369 = vector.broadcast %366 : f32 to vector<16x16xf32>
    %370 = arith.mulf %368, %369 : vector<16x16xf32>
    %371 = arith.addf %365, %370 : vector<16x16xf32>
    %c59 = arith.constant 59 : index
    %372 = memref.load %arg2[%c59] : memref<98xf32, #tpu.memory_space<smem>>
    %c1_195 = arith.constant 1 : index
    %c1_196 = arith.constant 1 : index
    %c3_197 = arith.constant 3 : index
    %373 = vector.load %arg5[%c1_195, %c1_196, %c3_197] : memref<2x22x22xf32, #tpu.memory_space<vmem>>, vector<1x16x16xf32>
    %374 = vector.shape_cast %373 : vector<1x16x16xf32> to vector<16x16xf32>
    %375 = vector.broadcast %372 : f32 to vector<16x16xf32>
    %376 = arith.mulf %374, %375 : vector<16x16xf32>
    %377 = arith.addf %371, %376 : vector<16x16xf32>
    %c60 = arith.constant 60 : index
    %378 = memref.load %arg2[%c60] : memref<98xf32, #tpu.memory_space<smem>>
    %c1_198 = arith.constant 1 : index
    %c1_199 = arith.constant 1 : index
    %c4_200 = arith.constant 4 : index
    %379 = vector.load %arg5[%c1_198, %c1_199, %c4_200] : memref<2x22x22xf32, #tpu.memory_space<vmem>>, vector<1x16x16xf32>
    %380 = vector.shape_cast %379 : vector<1x16x16xf32> to vector<16x16xf32>
    %381 = vector.broadcast %378 : f32 to vector<16x16xf32>
    %382 = arith.mulf %380, %381 : vector<16x16xf32>
    %383 = arith.addf %377, %382 : vector<16x16xf32>
    %c61 = arith.constant 61 : index
    %384 = memref.load %arg2[%c61] : memref<98xf32, #tpu.memory_space<smem>>
    %c1_201 = arith.constant 1 : index
    %c1_202 = arith.constant 1 : index
    %c5_203 = arith.constant 5 : index
    %385 = vector.load %arg5[%c1_201, %c1_202, %c5_203] : memref<2x22x22xf32, #tpu.memory_space<vmem>>, vector<1x16x16xf32>
    %386 = vector.shape_cast %385 : vector<1x16x16xf32> to vector<16x16xf32>
    %387 = vector.broadcast %384 : f32 to vector<16x16xf32>
    %388 = arith.mulf %386, %387 : vector<16x16xf32>
    %389 = arith.addf %383, %388 : vector<16x16xf32>
    %c62 = arith.constant 62 : index
    %390 = memref.load %arg2[%c62] : memref<98xf32, #tpu.memory_space<smem>>
    %c1_204 = arith.constant 1 : index
    %c1_205 = arith.constant 1 : index
    %c6_206 = arith.constant 6 : index
    %391 = vector.load %arg5[%c1_204, %c1_205, %c6_206] : memref<2x22x22xf32, #tpu.memory_space<vmem>>, vector<1x16x16xf32>
    %392 = vector.shape_cast %391 : vector<1x16x16xf32> to vector<16x16xf32>
    %393 = vector.broadcast %390 : f32 to vector<16x16xf32>
    %394 = arith.mulf %392, %393 : vector<16x16xf32>
    %395 = arith.addf %389, %394 : vector<16x16xf32>
    %c63 = arith.constant 63 : index
    %396 = memref.load %arg2[%c63] : memref<98xf32, #tpu.memory_space<smem>>
    %c1_207 = arith.constant 1 : index
    %c2_208 = arith.constant 2 : index
    %c0_209 = arith.constant 0 : index
    %397 = vector.load %arg5[%c1_207, %c2_208, %c0_209] : memref<2x22x22xf32, #tpu.memory_space<vmem>>, vector<1x16x16xf32>
    %398 = vector.shape_cast %397 : vector<1x16x16xf32> to vector<16x16xf32>
    %399 = vector.broadcast %396 : f32 to vector<16x16xf32>
    %400 = arith.mulf %398, %399 : vector<16x16xf32>
    %401 = arith.addf %395, %400 : vector<16x16xf32>
    %c64 = arith.constant 64 : index
    %402 = memref.load %arg2[%c64] : memref<98xf32, #tpu.memory_space<smem>>
    %c1_210 = arith.constant 1 : index
    %c2_211 = arith.constant 2 : index
    %c1_212 = arith.constant 1 : index
    %403 = vector.load %arg5[%c1_210, %c2_211, %c1_212] : memref<2x22x22xf32, #tpu.memory_space<vmem>>, vector<1x16x16xf32>
    %404 = vector.shape_cast %403 : vector<1x16x16xf32> to vector<16x16xf32>
    %405 = vector.broadcast %402 : f32 to vector<16x16xf32>
    %406 = arith.mulf %404, %405 : vector<16x16xf32>
    %407 = arith.addf %401, %406 : vector<16x16xf32>
    %c65 = arith.constant 65 : index
    %408 = memref.load %arg2[%c65] : memref<98xf32, #tpu.memory_space<smem>>
    %c1_213 = arith.constant 1 : index
    %c2_214 = arith.constant 2 : index
    %c2_215 = arith.constant 2 : index
    %409 = vector.load %arg5[%c1_213, %c2_214, %c2_215] : memref<2x22x22xf32, #tpu.memory_space<vmem>>, vector<1x16x16xf32>
    %410 = vector.shape_cast %409 : vector<1x16x16xf32> to vector<16x16xf32>
    %411 = vector.broadcast %408 : f32 to vector<16x16xf32>
    %412 = arith.mulf %410, %411 : vector<16x16xf32>
    %413 = arith.addf %407, %412 : vector<16x16xf32>
    %c66 = arith.constant 66 : index
    %414 = memref.load %arg2[%c66] : memref<98xf32, #tpu.memory_space<smem>>
    %c1_216 = arith.constant 1 : index
    %c2_217 = arith.constant 2 : index
    %c3_218 = arith.constant 3 : index
    %415 = vector.load %arg5[%c1_216, %c2_217, %c3_218] : memref<2x22x22xf32, #tpu.memory_space<vmem>>, vector<1x16x16xf32>
    %416 = vector.shape_cast %415 : vector<1x16x16xf32> to vector<16x16xf32>
    %417 = vector.broadcast %414 : f32 to vector<16x16xf32>
    %418 = arith.mulf %416, %417 : vector<16x16xf32>
    %419 = arith.addf %413, %418 : vector<16x16xf32>
    %c67 = arith.constant 67 : index
    %420 = memref.load %arg2[%c67] : memref<98xf32, #tpu.memory_space<smem>>
    %c1_219 = arith.constant 1 : index
    %c2_220 = arith.constant 2 : index
    %c4_221 = arith.constant 4 : index
    %421 = vector.load %arg5[%c1_219, %c2_220, %c4_221] : memref<2x22x22xf32, #tpu.memory_space<vmem>>, vector<1x16x16xf32>
    %422 = vector.shape_cast %421 : vector<1x16x16xf32> to vector<16x16xf32>
    %423 = vector.broadcast %420 : f32 to vector<16x16xf32>
    %424 = arith.mulf %422, %423 : vector<16x16xf32>
    %425 = arith.addf %419, %424 : vector<16x16xf32>
    %c68 = arith.constant 68 : index
    %426 = memref.load %arg2[%c68] : memref<98xf32, #tpu.memory_space<smem>>
    %c1_222 = arith.constant 1 : index
    %c2_223 = arith.constant 2 : index
    %c5_224 = arith.constant 5 : index
    %427 = vector.load %arg5[%c1_222, %c2_223, %c5_224] : memref<2x22x22xf32, #tpu.memory_space<vmem>>, vector<1x16x16xf32>
    %428 = vector.shape_cast %427 : vector<1x16x16xf32> to vector<16x16xf32>
    %429 = vector.broadcast %426 : f32 to vector<16x16xf32>
    %430 = arith.mulf %428, %429 : vector<16x16xf32>
    %431 = arith.addf %425, %430 : vector<16x16xf32>
    %c69 = arith.constant 69 : index
    %432 = memref.load %arg2[%c69] : memref<98xf32, #tpu.memory_space<smem>>
    %c1_225 = arith.constant 1 : index
    %c2_226 = arith.constant 2 : index
    %c6_227 = arith.constant 6 : index
    %433 = vector.load %arg5[%c1_225, %c2_226, %c6_227] : memref<2x22x22xf32, #tpu.memory_space<vmem>>, vector<1x16x16xf32>
    %434 = vector.shape_cast %433 : vector<1x16x16xf32> to vector<16x16xf32>
    %435 = vector.broadcast %432 : f32 to vector<16x16xf32>
    %436 = arith.mulf %434, %435 : vector<16x16xf32>
    %437 = arith.addf %431, %436 : vector<16x16xf32>
    %c70 = arith.constant 70 : index
    %438 = memref.load %arg2[%c70] : memref<98xf32, #tpu.memory_space<smem>>
    %c1_228 = arith.constant 1 : index
    %c3_229 = arith.constant 3 : index
    %c0_230 = arith.constant 0 : index
    %439 = vector.load %arg5[%c1_228, %c3_229, %c0_230] : memref<2x22x22xf32, #tpu.memory_space<vmem>>, vector<1x16x16xf32>
    %440 = vector.shape_cast %439 : vector<1x16x16xf32> to vector<16x16xf32>
    %441 = vector.broadcast %438 : f32 to vector<16x16xf32>
    %442 = arith.mulf %440, %441 : vector<16x16xf32>
    %443 = arith.addf %437, %442 : vector<16x16xf32>
    %c71 = arith.constant 71 : index
    %444 = memref.load %arg2[%c71] : memref<98xf32, #tpu.memory_space<smem>>
    %c1_231 = arith.constant 1 : index
    %c3_232 = arith.constant 3 : index
    %c1_233 = arith.constant 1 : index
    %445 = vector.load %arg5[%c1_231, %c3_232, %c1_233] : memref<2x22x22xf32, #tpu.memory_space<vmem>>, vector<1x16x16xf32>
    %446 = vector.shape_cast %445 : vector<1x16x16xf32> to vector<16x16xf32>
    %447 = vector.broadcast %444 : f32 to vector<16x16xf32>
    %448 = arith.mulf %446, %447 : vector<16x16xf32>
    %449 = arith.addf %443, %448 : vector<16x16xf32>
    %c72 = arith.constant 72 : index
    %450 = memref.load %arg2[%c72] : memref<98xf32, #tpu.memory_space<smem>>
    %c1_234 = arith.constant 1 : index
    %c3_235 = arith.constant 3 : index
    %c2_236 = arith.constant 2 : index
    %451 = vector.load %arg5[%c1_234, %c3_235, %c2_236] : memref<2x22x22xf32, #tpu.memory_space<vmem>>, vector<1x16x16xf32>
    %452 = vector.shape_cast %451 : vector<1x16x16xf32> to vector<16x16xf32>
    %453 = vector.broadcast %450 : f32 to vector<16x16xf32>
    %454 = arith.mulf %452, %453 : vector<16x16xf32>
    %455 = arith.addf %449, %454 : vector<16x16xf32>
    %c73 = arith.constant 73 : index
    %456 = memref.load %arg2[%c73] : memref<98xf32, #tpu.memory_space<smem>>
    %c1_237 = arith.constant 1 : index
    %c3_238 = arith.constant 3 : index
    %c3_239 = arith.constant 3 : index
    %457 = vector.load %arg5[%c1_237, %c3_238, %c3_239] : memref<2x22x22xf32, #tpu.memory_space<vmem>>, vector<1x16x16xf32>
    %458 = vector.shape_cast %457 : vector<1x16x16xf32> to vector<16x16xf32>
    %459 = vector.broadcast %456 : f32 to vector<16x16xf32>
    %460 = arith.mulf %458, %459 : vector<16x16xf32>
    %461 = arith.addf %455, %460 : vector<16x16xf32>
    %c74 = arith.constant 74 : index
    %462 = memref.load %arg2[%c74] : memref<98xf32, #tpu.memory_space<smem>>
    %c1_240 = arith.constant 1 : index
    %c3_241 = arith.constant 3 : index
    %c4_242 = arith.constant 4 : index
    %463 = vector.load %arg5[%c1_240, %c3_241, %c4_242] : memref<2x22x22xf32, #tpu.memory_space<vmem>>, vector<1x16x16xf32>
    %464 = vector.shape_cast %463 : vector<1x16x16xf32> to vector<16x16xf32>
    %465 = vector.broadcast %462 : f32 to vector<16x16xf32>
    %466 = arith.mulf %464, %465 : vector<16x16xf32>
    %467 = arith.addf %461, %466 : vector<16x16xf32>
    %c75 = arith.constant 75 : index
    %468 = memref.load %arg2[%c75] : memref<98xf32, #tpu.memory_space<smem>>
    %c1_243 = arith.constant 1 : index
    %c3_244 = arith.constant 3 : index
    %c5_245 = arith.constant 5 : index
    %469 = vector.load %arg5[%c1_243, %c3_244, %c5_245] : memref<2x22x22xf32, #tpu.memory_space<vmem>>, vector<1x16x16xf32>
    %470 = vector.shape_cast %469 : vector<1x16x16xf32> to vector<16x16xf32>
    %471 = vector.broadcast %468 : f32 to vector<16x16xf32>
    %472 = arith.mulf %470, %471 : vector<16x16xf32>
    %473 = arith.addf %467, %472 : vector<16x16xf32>
    %c76 = arith.constant 76 : index
    %474 = memref.load %arg2[%c76] : memref<98xf32, #tpu.memory_space<smem>>
    %c1_246 = arith.constant 1 : index
    %c3_247 = arith.constant 3 : index
    %c6_248 = arith.constant 6 : index
    %475 = vector.load %arg5[%c1_246, %c3_247, %c6_248] : memref<2x22x22xf32, #tpu.memory_space<vmem>>, vector<1x16x16xf32>
    %476 = vector.shape_cast %475 : vector<1x16x16xf32> to vector<16x16xf32>
    %477 = vector.broadcast %474 : f32 to vector<16x16xf32>
    %478 = arith.mulf %476, %477 : vector<16x16xf32>
    %479 = arith.addf %473, %478 : vector<16x16xf32>
    %c77 = arith.constant 77 : index
    %480 = memref.load %arg2[%c77] : memref<98xf32, #tpu.memory_space<smem>>
    %c1_249 = arith.constant 1 : index
    %c4_250 = arith.constant 4 : index
    %c0_251 = arith.constant 0 : index
    %481 = vector.load %arg5[%c1_249, %c4_250, %c0_251] : memref<2x22x22xf32, #tpu.memory_space<vmem>>, vector<1x16x16xf32>
    %482 = vector.shape_cast %481 : vector<1x16x16xf32> to vector<16x16xf32>
    %483 = vector.broadcast %480 : f32 to vector<16x16xf32>
    %484 = arith.mulf %482, %483 : vector<16x16xf32>
    %485 = arith.addf %479, %484 : vector<16x16xf32>
    %c78 = arith.constant 78 : index
    %486 = memref.load %arg2[%c78] : memref<98xf32, #tpu.memory_space<smem>>
    %c1_252 = arith.constant 1 : index
    %c4_253 = arith.constant 4 : index
    %c1_254 = arith.constant 1 : index
    %487 = vector.load %arg5[%c1_252, %c4_253, %c1_254] : memref<2x22x22xf32, #tpu.memory_space<vmem>>, vector<1x16x16xf32>
    %488 = vector.shape_cast %487 : vector<1x16x16xf32> to vector<16x16xf32>
    %489 = vector.broadcast %486 : f32 to vector<16x16xf32>
    %490 = arith.mulf %488, %489 : vector<16x16xf32>
    %491 = arith.addf %485, %490 : vector<16x16xf32>
    %c79 = arith.constant 79 : index
    %492 = memref.load %arg2[%c79] : memref<98xf32, #tpu.memory_space<smem>>
    %c1_255 = arith.constant 1 : index
    %c4_256 = arith.constant 4 : index
    %c2_257 = arith.constant 2 : index
    %493 = vector.load %arg5[%c1_255, %c4_256, %c2_257] : memref<2x22x22xf32, #tpu.memory_space<vmem>>, vector<1x16x16xf32>
    %494 = vector.shape_cast %493 : vector<1x16x16xf32> to vector<16x16xf32>
    %495 = vector.broadcast %492 : f32 to vector<16x16xf32>
    %496 = arith.mulf %494, %495 : vector<16x16xf32>
    %497 = arith.addf %491, %496 : vector<16x16xf32>
    %c80 = arith.constant 80 : index
    %498 = memref.load %arg2[%c80] : memref<98xf32, #tpu.memory_space<smem>>
    %c1_258 = arith.constant 1 : index
    %c4_259 = arith.constant 4 : index
    %c3_260 = arith.constant 3 : index
    %499 = vector.load %arg5[%c1_258, %c4_259, %c3_260] : memref<2x22x22xf32, #tpu.memory_space<vmem>>, vector<1x16x16xf32>
    %500 = vector.shape_cast %499 : vector<1x16x16xf32> to vector<16x16xf32>
    %501 = vector.broadcast %498 : f32 to vector<16x16xf32>
    %502 = arith.mulf %500, %501 : vector<16x16xf32>
    %503 = arith.addf %497, %502 : vector<16x16xf32>
    %c81 = arith.constant 81 : index
    %504 = memref.load %arg2[%c81] : memref<98xf32, #tpu.memory_space<smem>>
    %c1_261 = arith.constant 1 : index
    %c4_262 = arith.constant 4 : index
    %c4_263 = arith.constant 4 : index
    %505 = vector.load %arg5[%c1_261, %c4_262, %c4_263] : memref<2x22x22xf32, #tpu.memory_space<vmem>>, vector<1x16x16xf32>
    %506 = vector.shape_cast %505 : vector<1x16x16xf32> to vector<16x16xf32>
    %507 = vector.broadcast %504 : f32 to vector<16x16xf32>
    %508 = arith.mulf %506, %507 : vector<16x16xf32>
    %509 = arith.addf %503, %508 : vector<16x16xf32>
    %c82 = arith.constant 82 : index
    %510 = memref.load %arg2[%c82] : memref<98xf32, #tpu.memory_space<smem>>
    %c1_264 = arith.constant 1 : index
    %c4_265 = arith.constant 4 : index
    %c5_266 = arith.constant 5 : index
    %511 = vector.load %arg5[%c1_264, %c4_265, %c5_266] : memref<2x22x22xf32, #tpu.memory_space<vmem>>, vector<1x16x16xf32>
    %512 = vector.shape_cast %511 : vector<1x16x16xf32> to vector<16x16xf32>
    %513 = vector.broadcast %510 : f32 to vector<16x16xf32>
    %514 = arith.mulf %512, %513 : vector<16x16xf32>
    %515 = arith.addf %509, %514 : vector<16x16xf32>
    %c83 = arith.constant 83 : index
    %516 = memref.load %arg2[%c83] : memref<98xf32, #tpu.memory_space<smem>>
    %c1_267 = arith.constant 1 : index
    %c4_268 = arith.constant 4 : index
    %c6_269 = arith.constant 6 : index
    %517 = vector.load %arg5[%c1_267, %c4_268, %c6_269] : memref<2x22x22xf32, #tpu.memory_space<vmem>>, vector<1x16x16xf32>
    %518 = vector.shape_cast %517 : vector<1x16x16xf32> to vector<16x16xf32>
    %519 = vector.broadcast %516 : f32 to vector<16x16xf32>
    %520 = arith.mulf %518, %519 : vector<16x16xf32>
    %521 = arith.addf %515, %520 : vector<16x16xf32>
    %c84 = arith.constant 84 : index
    %522 = memref.load %arg2[%c84] : memref<98xf32, #tpu.memory_space<smem>>
    %c1_270 = arith.constant 1 : index
    %c5_271 = arith.constant 5 : index
    %c0_272 = arith.constant 0 : index
    %523 = vector.load %arg5[%c1_270, %c5_271, %c0_272] : memref<2x22x22xf32, #tpu.memory_space<vmem>>, vector<1x16x16xf32>
    %524 = vector.shape_cast %523 : vector<1x16x16xf32> to vector<16x16xf32>
    %525 = vector.broadcast %522 : f32 to vector<16x16xf32>
    %526 = arith.mulf %524, %525 : vector<16x16xf32>
    %527 = arith.addf %521, %526 : vector<16x16xf32>
    %c85 = arith.constant 85 : index
    %528 = memref.load %arg2[%c85] : memref<98xf32, #tpu.memory_space<smem>>
    %c1_273 = arith.constant 1 : index
    %c5_274 = arith.constant 5 : index
    %c1_275 = arith.constant 1 : index
    %529 = vector.load %arg5[%c1_273, %c5_274, %c1_275] : memref<2x22x22xf32, #tpu.memory_space<vmem>>, vector<1x16x16xf32>
    %530 = vector.shape_cast %529 : vector<1x16x16xf32> to vector<16x16xf32>
    %531 = vector.broadcast %528 : f32 to vector<16x16xf32>
    %532 = arith.mulf %530, %531 : vector<16x16xf32>
    %533 = arith.addf %527, %532 : vector<16x16xf32>
    %c86 = arith.constant 86 : index
    %534 = memref.load %arg2[%c86] : memref<98xf32, #tpu.memory_space<smem>>
    %c1_276 = arith.constant 1 : index
    %c5_277 = arith.constant 5 : index
    %c2_278 = arith.constant 2 : index
    %535 = vector.load %arg5[%c1_276, %c5_277, %c2_278] : memref<2x22x22xf32, #tpu.memory_space<vmem>>, vector<1x16x16xf32>
    %536 = vector.shape_cast %535 : vector<1x16x16xf32> to vector<16x16xf32>
    %537 = vector.broadcast %534 : f32 to vector<16x16xf32>
    %538 = arith.mulf %536, %537 : vector<16x16xf32>
    %539 = arith.addf %533, %538 : vector<16x16xf32>
    %c87 = arith.constant 87 : index
    %540 = memref.load %arg2[%c87] : memref<98xf32, #tpu.memory_space<smem>>
    %c1_279 = arith.constant 1 : index
    %c5_280 = arith.constant 5 : index
    %c3_281 = arith.constant 3 : index
    %541 = vector.load %arg5[%c1_279, %c5_280, %c3_281] : memref<2x22x22xf32, #tpu.memory_space<vmem>>, vector<1x16x16xf32>
    %542 = vector.shape_cast %541 : vector<1x16x16xf32> to vector<16x16xf32>
    %543 = vector.broadcast %540 : f32 to vector<16x16xf32>
    %544 = arith.mulf %542, %543 : vector<16x16xf32>
    %545 = arith.addf %539, %544 : vector<16x16xf32>
    %c88 = arith.constant 88 : index
    %546 = memref.load %arg2[%c88] : memref<98xf32, #tpu.memory_space<smem>>
    %c1_282 = arith.constant 1 : index
    %c5_283 = arith.constant 5 : index
    %c4_284 = arith.constant 4 : index
    %547 = vector.load %arg5[%c1_282, %c5_283, %c4_284] : memref<2x22x22xf32, #tpu.memory_space<vmem>>, vector<1x16x16xf32>
    %548 = vector.shape_cast %547 : vector<1x16x16xf32> to vector<16x16xf32>
    %549 = vector.broadcast %546 : f32 to vector<16x16xf32>
    %550 = arith.mulf %548, %549 : vector<16x16xf32>
    %551 = arith.addf %545, %550 : vector<16x16xf32>
    %c89 = arith.constant 89 : index
    %552 = memref.load %arg2[%c89] : memref<98xf32, #tpu.memory_space<smem>>
    %c1_285 = arith.constant 1 : index
    %c5_286 = arith.constant 5 : index
    %c5_287 = arith.constant 5 : index
    %553 = vector.load %arg5[%c1_285, %c5_286, %c5_287] : memref<2x22x22xf32, #tpu.memory_space<vmem>>, vector<1x16x16xf32>
    %554 = vector.shape_cast %553 : vector<1x16x16xf32> to vector<16x16xf32>
    %555 = vector.broadcast %552 : f32 to vector<16x16xf32>
    %556 = arith.mulf %554, %555 : vector<16x16xf32>
    %557 = arith.addf %551, %556 : vector<16x16xf32>
    %c90 = arith.constant 90 : index
    %558 = memref.load %arg2[%c90] : memref<98xf32, #tpu.memory_space<smem>>
    %c1_288 = arith.constant 1 : index
    %c5_289 = arith.constant 5 : index
    %c6_290 = arith.constant 6 : index
    %559 = vector.load %arg5[%c1_288, %c5_289, %c6_290] : memref<2x22x22xf32, #tpu.memory_space<vmem>>, vector<1x16x16xf32>
    %560 = vector.shape_cast %559 : vector<1x16x16xf32> to vector<16x16xf32>
    %561 = vector.broadcast %558 : f32 to vector<16x16xf32>
    %562 = arith.mulf %560, %561 : vector<16x16xf32>
    %563 = arith.addf %557, %562 : vector<16x16xf32>
    %c91 = arith.constant 91 : index
    %564 = memref.load %arg2[%c91] : memref<98xf32, #tpu.memory_space<smem>>
    %c1_291 = arith.constant 1 : index
    %c6_292 = arith.constant 6 : index
    %c0_293 = arith.constant 0 : index
    %565 = vector.load %arg5[%c1_291, %c6_292, %c0_293] : memref<2x22x22xf32, #tpu.memory_space<vmem>>, vector<1x16x16xf32>
    %566 = vector.shape_cast %565 : vector<1x16x16xf32> to vector<16x16xf32>
    %567 = vector.broadcast %564 : f32 to vector<16x16xf32>
    %568 = arith.mulf %566, %567 : vector<16x16xf32>
    %569 = arith.addf %563, %568 : vector<16x16xf32>
    %c92 = arith.constant 92 : index
    %570 = memref.load %arg2[%c92] : memref<98xf32, #tpu.memory_space<smem>>
    %c1_294 = arith.constant 1 : index
    %c6_295 = arith.constant 6 : index
    %c1_296 = arith.constant 1 : index
    %571 = vector.load %arg5[%c1_294, %c6_295, %c1_296] : memref<2x22x22xf32, #tpu.memory_space<vmem>>, vector<1x16x16xf32>
    %572 = vector.shape_cast %571 : vector<1x16x16xf32> to vector<16x16xf32>
    %573 = vector.broadcast %570 : f32 to vector<16x16xf32>
    %574 = arith.mulf %572, %573 : vector<16x16xf32>
    %575 = arith.addf %569, %574 : vector<16x16xf32>
    %c93 = arith.constant 93 : index
    %576 = memref.load %arg2[%c93] : memref<98xf32, #tpu.memory_space<smem>>
    %c1_297 = arith.constant 1 : index
    %c6_298 = arith.constant 6 : index
    %c2_299 = arith.constant 2 : index
    %577 = vector.load %arg5[%c1_297, %c6_298, %c2_299] : memref<2x22x22xf32, #tpu.memory_space<vmem>>, vector<1x16x16xf32>
    %578 = vector.shape_cast %577 : vector<1x16x16xf32> to vector<16x16xf32>
    %579 = vector.broadcast %576 : f32 to vector<16x16xf32>
    %580 = arith.mulf %578, %579 : vector<16x16xf32>
    %581 = arith.addf %575, %580 : vector<16x16xf32>
    %c94 = arith.constant 94 : index
    %582 = memref.load %arg2[%c94] : memref<98xf32, #tpu.memory_space<smem>>
    %c1_300 = arith.constant 1 : index
    %c6_301 = arith.constant 6 : index
    %c3_302 = arith.constant 3 : index
    %583 = vector.load %arg5[%c1_300, %c6_301, %c3_302] : memref<2x22x22xf32, #tpu.memory_space<vmem>>, vector<1x16x16xf32>
    %584 = vector.shape_cast %583 : vector<1x16x16xf32> to vector<16x16xf32>
    %585 = vector.broadcast %582 : f32 to vector<16x16xf32>
    %586 = arith.mulf %584, %585 : vector<16x16xf32>
    %587 = arith.addf %581, %586 : vector<16x16xf32>
    %c95 = arith.constant 95 : index
    %588 = memref.load %arg2[%c95] : memref<98xf32, #tpu.memory_space<smem>>
    %c1_303 = arith.constant 1 : index
    %c6_304 = arith.constant 6 : index
    %c4_305 = arith.constant 4 : index
    %589 = vector.load %arg5[%c1_303, %c6_304, %c4_305] : memref<2x22x22xf32, #tpu.memory_space<vmem>>, vector<1x16x16xf32>
    %590 = vector.shape_cast %589 : vector<1x16x16xf32> to vector<16x16xf32>
    %591 = vector.broadcast %588 : f32 to vector<16x16xf32>
    %592 = arith.mulf %590, %591 : vector<16x16xf32>
    %593 = arith.addf %587, %592 : vector<16x16xf32>
    %c96 = arith.constant 96 : index
    %594 = memref.load %arg2[%c96] : memref<98xf32, #tpu.memory_space<smem>>
    %c1_306 = arith.constant 1 : index
    %c6_307 = arith.constant 6 : index
    %c5_308 = arith.constant 5 : index
    %595 = vector.load %arg5[%c1_306, %c6_307, %c5_308] : memref<2x22x22xf32, #tpu.memory_space<vmem>>, vector<1x16x16xf32>
    %596 = vector.shape_cast %595 : vector<1x16x16xf32> to vector<16x16xf32>
    %597 = vector.broadcast %594 : f32 to vector<16x16xf32>
    %598 = arith.mulf %596, %597 : vector<16x16xf32>
    %599 = arith.addf %593, %598 : vector<16x16xf32>
    %c97 = arith.constant 97 : index
    %600 = memref.load %arg2[%c97] : memref<98xf32, #tpu.memory_space<smem>>
    %c1_309 = arith.constant 1 : index
    %c6_310 = arith.constant 6 : index
    %c6_311 = arith.constant 6 : index
    %601 = vector.load %arg5[%c1_309, %c6_310, %c6_311] : memref<2x22x22xf32, #tpu.memory_space<vmem>>, vector<1x16x16xf32>
    %602 = vector.shape_cast %601 : vector<1x16x16xf32> to vector<16x16xf32>
    %603 = vector.broadcast %600 : f32 to vector<16x16xf32>
    %604 = arith.mulf %602, %603 : vector<16x16xf32>
    %605 = arith.addf %599, %604 : vector<16x16xf32>
    %cst_312 = arith.constant 0.000000e+00 : f32
    %606 = vector.broadcast %cst_312 : f32 to vector<16x16xf32>
    %607 = arith.subf %606, %605 : vector<16x16xf32>
    %608 = math.exp %607 : vector<16x16xf32>
    %cst_313 = arith.constant 1.000000e+00 : f32
    %609 = vector.broadcast %cst_313 : f32 to vector<16x16xf32>
    %610 = arith.addf %609, %608 : vector<16x16xf32>
    %cst_314 = arith.constant 1.000000e+00 : f32
    %611 = vector.broadcast %cst_314 : f32 to vector<16x16xf32>
    %612 = arith.divf %611, %610 : vector<16x16xf32>
    %c0_315 = arith.constant 0 : index
    %c0_316 = arith.constant 0 : index
    %c0_317 = arith.constant 0 : index
    %c0_318 = arith.constant 0 : index
    %613 = vector.load %arg4[%c0_315, %c0_316, %c0_317, %c0_318] : memref<1x1x16x16xf32, #tpu.memory_space<vmem>>, vector<1x1x16x16xf32>
    %614 = vector.shape_cast %613 : vector<1x1x16x16xf32> to vector<16x16xf32>
    %615 = vector.shape_cast %612 : vector<16x16xf32> to vector<1x1x16x16xf32>
    tpu.vector_store %arg4[%c0_315, %c0_316, %c0_317, %c0_318], %615 {strides = array<i32>} : memref<1x1x16x16xf32, #tpu.memory_space<vmem>>, vector<1x1x16x16xf32>,
    return
  }
  func.func @transform_0(%arg0: i32) -> (i32, i32, i32, i32) {
    %c0_i32 = arith.constant 0 : i32
    %c0_i32_0 = arith.constant 0 : i32
    %c0_i32_1 = arith.constant 0 : i32
    %c0_i32_2 = arith.constant 0 : i32
    return %arg0, %c0_i32, %c0_i32_0, %c0_i32_1 : i32, i32, i32, i32
  }
  func.func @transform_1(%arg0: i32) -> i32 {
    %c0_i32 = arith.constant 0 : i32
    %c0_i32_0 = arith.constant 0 : i32
    return %c0_i32 : i32
  }
  func.func @transform_2(%arg0: i32) -> i32 {
    %c0_i32 = arith.constant 0 : i32
    %c0_i32_0 = arith.constant 0 : i32
    return %c0_i32 : i32
  }
  func.func @transform_3(%arg0: i32) -> (i32, i32, i32, i32) {
    %c0_i32 = arith.constant 0 : i32
    %c0_i32_0 = arith.constant 0 : i32
    %c0_i32_1 = arith.constant 0 : i32
    %c0_i32_2 = arith.constant 0 : i32
    return %arg0, %c0_i32, %c0_i32_0, %c0_i32_1 : i32, i32, i32, i32
  }
}

</mosaic_0001>

<llo_original>
// kernel: spatial_attention_forward.1
$region0: #{spatial_attention_forward.1}
  #allocation0 [shape = 'u32[]', space=smem, size = 0x4, offset = 0x4, fixed_abs, tag = 'smem constant byte address 0x4 - core index']
  #allocation1 [shape = 'u32[144,128]{1,0:T(1,128)}', space=vmem, size = 0x12000, scoped, tag = 'internal scratch']
  #allocation2 [shape = 'f32[2,22,22]{2,1,0:T(8,128)}', space=vmem, size = 0x6000, scoped, tag = 'scratch operand']
  #allocation3 [shape = 'f32[1]{0:T(128)S(6)}', space=smem, size = 0x200, scoped, tag = 'scoped memory for spatial_attention_forward.1']
  %s0 = inlined_call_operand.hbm [shape: f32[2,4,16,16], index: 0, kind: input, shape index: {}]
  %s1 = inlined_call_operand.vmem [shape: f32[98], index: 1, kind: input, shape index: {}]
  %s2 = inlined_call_operand.<no memory space> [shape: f32[1], index: 2, kind: input, shape index: {}]
  %s3 = inlined_call_operand.hbm [shape: f32[2,1,16,16], index: 3, kind: output, shape index: {}]
  %s4 = sld [smem:[#allocation0]]
  $region53: #{spatial_attention_forward.1} parent=0
    _
  %s6 = ssub.s32 1, %s4
  %s7 = scalar_select 0, %s6, %s4
  %8 = sst [smem:[#allocation3]] %s2
  $region1: #{spatial_attention_forward.1} parent=0
    #allocation4 [shape = 'u8[65536]{0}', space=vmem, size = 0x10000, scoped, tag = 'input window, operand 0']
    #allocation5 [shape = 's32[2]{0}', space=sflag, size = 0x8, scoped, tag = 'scoped memory for spatial_attention_forward.1']
    #allocation6 [shape = 's32[2]{0}', space=sflag, size = 0x8, scoped, tag = 'scoped memory for spatial_attention_forward.1']
    #allocation7 [shape = 's32[2]{0}', space=sflag, size = 0x8, scoped, tag = 'scoped memory for spatial_attention_forward.1']
    #allocation8 [shape = 'u8[512]{0}', space=smem, size = 0x200, scoped, tag = 'input window, operand 1, single buffered']
    #allocation9 [shape = 'u8[16384]{0}', space=vmem, size = 0x4000, scoped, tag = 'output window, operand 0']
    %9 = vsyncpa [#allocation5], 0
    %s10 = scalar_lea.sflag [#allocation5], 1
    %11 = vsyncpa %s10, 0
    %12 = vsyncpa [#allocation7], 0
    %13 = vsyncpa [#allocation6], 0
    %s14 = scalar_lea.sflag [#allocation6], 1
    %15 = vsyncpa %s14, 0
    loop: start=0, step=1, limit=4
    $region2: #{spatial_attention_forward.1} parent=1 // loop_pre_header
      _
    $region3: #{spatial_attention_forward.1} parent=1 // loop_header
      %s17 = sphi 0, %s21
      %p18 = scmp.ge.s32.totalorder %s17, 4
      %s27 = sphi 0, %s29
      %s30 = sphi 0, %s27
      %s31 = sphi 0, %s30
      %s47 = sphi 0, %s31
      %s51 = sphi 0, %s51
      %s53 = sphi 0, %s51
      %s54 = sphi 0, %s53
      %s68 = sphi 0, %s54
      %s72 = sphi 0, %s72
      %s74 = sphi 0, %s72
      %s75 = sphi 0, %s74
      %s89 = sphi 0, %s75
      %s95 = sphi 0, %s97
      %s98 = sphi 0, %s95
      %s99 = sphi 0, %s98
      %s115 = sphi 0, %s99
    $region4: #{spatial_attention_forward.1} parent=1 // loop_header_branch
      %20 = sbr.rel (%p18) target = $region8
    $region5: #{spatial_attention_forward.1} parent=1 // loop_body
      %s22 = ssub.s32 %s17, 1
      %s23 = ssub.s32 %s17, 2
      %s24 = sadd.s32 %s17, 1
      %s25 = ssub.s32 %s17, %s24
      %p26 = scmp.eq.s32.totalorder %s25, 0
      %s28 = sadd.s32 %s27, 1
      %s29 = scalar_select %p26, %s27, %s28
      %p32 = pneg %p26
      %p33 = scmp.eq.s32.totalorder %s17, 1
      %p34 = por %p32, %p33
      %p35 = scmp.ne.s32.totalorder %s27, %s30
      %p36 = scmp.eq.s32.totalorder %s17, 0
      %p37 = por %p35, %p36
      %p38 = scmp.ne.s32.totalorder %s27, %s30
      %p39 = scmp.eq.s32.totalorder %s22, 1
      %p40 = por %p38, %p39
      %p41 = scmp.ne.s32.totalorder %s30, %s31
      %p42 = scmp.eq.s32.totalorder %s22, 0
      %p43 = por %p41, %p42
      %p44 = scmp.ne.s32.totalorder %s30, %s31
      %p45 = scmp.eq.s32.totalorder %s23, 1
      %p46 = por %p44, %p45
      %p48 = scmp.ne.s32.totalorder %s31, %s47
      %p49 = scmp.eq.s32.totalorder %s23, 0
      %p50 = por %p48, %p49
      %s52 = sadd.s32 %s51, 1
      %p55 = scmp.eq.s32.totalorder %s17, 1
      %p56 = scmp.ne.s32.totalorder %s51, %s53
      %p57 = scmp.eq.s32.totalorder %s17, 0
      %p58 = por %p56, %p57
      %p59 = scmp.ne.s32.totalorder %s51, %s53
      %p60 = scmp.eq.s32.totalorder %s22, 1
      %p61 = por %p59, %p60
      %p62 = scmp.ne.s32.totalorder %s53, %s54
      %p63 = scmp.eq.s32.totalorder %s22, 0
      %p64 = por %p62, %p63
      %p65 = scmp.ne.s32.totalorder %s53, %s54
      %p66 = scmp.eq.s32.totalorder %s23, 1
      %p67 = por %p65, %p66
      %p69 = scmp.ne.s32.totalorder %s54, %s68
      %p70 = scmp.eq.s32.totalorder %s23, 0
      %p71 = por %p69, %p70
      %s73 = sadd.s32 %s72, 1
      %p76 = scmp.eq.s32.totalorder %s17, 1
      %p77 = scmp.ne.s32.totalorder %s72, %s74
      %p78 = scmp.eq.s32.totalorder %s17, 0
      %p79 = por %p77, %p78
      %p80 = scmp.ne.s32.totalorder %s72, %s74
      %p81 = scmp.eq.s32.totalorder %s22, 1
      %p82 = por %p80, %p81
      %p83 = scmp.ne.s32.totalorder %s74, %s75
      %p84 = scmp.eq.s32.totalorder %s22, 0
      %p85 = por %p83, %p84
      %p86 = scmp.ne.s32.totalorder %s74, %s75
      %p87 = scmp.eq.s32.totalorder %s23, 1
      %p88 = por %p86, %p87
      %p90 = scmp.ne.s32.totalorder %s75, %s89
      %p91 = scmp.eq.s32.totalorder %s23, 0
      %p92 = por %p90, %p91
      %s93 = ssub.s32 %s17, %s24
      %p94 = scmp.eq.s32.totalorder %s93, 0
      %s96 = sadd.s32 %s95, 1
      %s97 = scalar_select %p94, %s95, %s96
      %p100 = pneg %p94
      %p101 = scmp.eq.s32.totalorder %s17, 1
      %p102 = por %p100, %p101
      %p103 = scmp.ne.s32.totalorder %s95, %s98
      %p104 = scmp.eq.s32.totalorder %s17, 0
      %p105 = por %p103, %p104
      %p106 = scmp.ne.s32.totalorder %s95, %s98
      %p107 = scmp.eq.s32.totalorder %s22, 1
      %p108 = por %p106, %p107
      %p109 = scmp.ne.s32.totalorder %s98, %s99
      %p110 = scmp.eq.s32.totalorder %s22, 0
      %p111 = por %p109, %p110
      %p112 = scmp.ne.s32.totalorder %s98, %s99
      %p113 = scmp.eq.s32.totalorder %s23, 1
      %p114 = por %p112, %p113
      %p116 = scmp.ne.s32.totalorder %s99, %s115
      %p117 = scmp.eq.s32.totalorder %s23, 0
      %p118 = por %p116, %p117
      %p119 = scmp.le.s32.totalorder 1, %s17
      %p120 = scmp.lt.s32.totalorder %s17, 3
      %p121 = pnand %p119, %p120
      %p122 = pneg %p121
      // Predicated region
      $region9: #{spatial_attention_forward.1} parent=5 // pred_check
        _
      $region10: #{spatial_attention_forward.1} parent=5 // pred_check_branch
        %124 = sbr.rel (%p121) target = $region12
      $region11: #{spatial_attention_forward.1} parent=5 // pred_region
        %s125 = ssub.s32 %s17, 1
        // Predicated region
        $region13: #{spatial_attention_forward.1} parent=11 // pred_check
          %p126 = pneg %p64
        $region14: #{spatial_attention_forward.1} parent=11 // pred_check_branch
          %128 = sbr.rel (%p126) target = $region16
        $region15: #{spatial_attention_forward.1} parent=11 // pred_region
          %s130 = ssub.s32 16, 16
          %131 = vsyncadd [#allocation7], %s130
          %s133 = sshll.u32 %s1, 4
          %s134 = int_to_ptr.vmem [resolvable:$true] %s133
          %136 = dma.vmem_to_smem %s134, 16, [#allocation8], [#allocation7]
        $region16: #{spatial_attention_forward.1} parent=11 // pred_fallthru
          _
        // Predicated region
        $region17: #{spatial_attention_forward.1} parent=11 // pred_check
          %p137 = pneg %p85
        $region18: #{spatial_attention_forward.1} parent=11 // pred_check_branch
          %139 = sbr.rel (%p137) target = $region20
        $region19: #{spatial_attention_forward.1} parent=11 // pred_region
          _
        $region20: #{spatial_attention_forward.1} parent=11 // pred_fallthru
          _
      $region12: #{spatial_attention_forward.1} parent=5 // pred_fallthru
        _
      %p140 = scmp.lt.s32.totalorder %s17, 2
      // Predicated region
      $region21: #{spatial_attention_forward.1} parent=5 // pred_check
        %p141 = pneg %p140
      $region22: #{spatial_attention_forward.1} parent=5 // pred_check_branch
        %143 = sbr.rel (%p141) target = $region24
      $region23: #{spatial_attention_forward.1} parent=5 // pred_region
        // Predicated region
        $region25: #{spatial_attention_forward.1} parent=23 // pred_check
          %p144 = pneg %p37
        $region26: #{spatial_attention_forward.1} parent=23 // pred_check_branch
          %146 = sbr.rel (%p144) target = $region28
        $region27: #{spatial_attention_forward.1} parent=23 // pred_region
          %s147 = sand.u32 %s27, 1
          %s148 = scalar_lea.sflag [#allocation5], %s147
          %s149 = sand.u32 %s27, 1
          %s150 = smul.addr %s149, 64
          %s151 = scalar_lea.vmem [#allocation4], %s150
          %s153 = ssub.s32 1024, 1024
          %154 = vsyncadd %s148, %s153
          %s155 = smul.addr %s17, 8
          %s156 = smul.addr %s155, 128
          %s157 = scalar_lea.hbm %s0, %s156
          %s158 = sshll.u32 %s151, 4
          %s159 = int_to_ptr.vmem [resolvable:$true] %s158
          %164 = dma.hbm_to_vmem [thread:$0]  %s157, 1024, %s159, %s148, 128, 128, 8
        $region28: #{spatial_attention_forward.1} parent=23 // pred_fallthru
          _
      $region24: #{spatial_attention_forward.1} parent=5 // pred_fallthru
        _
      %p165 = scmp.le.s32.totalorder 1, %s17
      %p166 = scmp.lt.s32.totalorder %s17, 3
      %p167 = pnand %p165, %p166
      %p168 = pneg %p167
      // Predicated region
      $region29: #{spatial_attention_forward.1} parent=5 // pred_check
        _
      $region30: #{spatial_attention_forward.1} parent=5 // pred_check_branch
        %170 = sbr.rel (%p167) target = $region32
      $region31: #{spatial_attention_forward.1} parent=5 // pred_region
        %s171 = ssub.s32 %s17, 1
        %s172 = sand.u32 %s30, 1
        %s173 = scalar_lea.sflag [#allocation5], %s172
        %s174 = sand.u32 %s30, 1
        %s175 = smul.addr %s174, 64
        %s176 = scalar_lea.vmem [#allocation4], %s175
        // Predicated region
        $region33: #{spatial_attention_forward.1} parent=31 // pred_check
          %p177 = pneg %p43
        $region34: #{spatial_attention_forward.1} parent=31 // pred_check_branch
          %179 = sbr.rel (%p177) target = $region36
        $region35: #{spatial_attention_forward.1} parent=31 // pred_region
          %180 = dma.done %s173, 1024
        $region36: #{spatial_attention_forward.1} parent=31 // pred_fallthru
          _
        // Predicated region
        $region37: #{spatial_attention_forward.1} parent=31 // pred_check
          %p181 = pneg %p64
        $region38: #{spatial_attention_forward.1} parent=31 // pred_check_branch
          %183 = sbr.rel (%p181) target = $region40
        $region39: #{spatial_attention_forward.1} parent=31 // pred_region
          %184 = dma.done [#allocation7], 16
        $region40: #{spatial_attention_forward.1} parent=31 // pred_fallthru
          _
        %185 = sfence
        %s186 = sand.u32 %s30, 1
        %s187 = scalar_lea.sflag [#allocation5], %s186
        %s188 = sand.u32 %s30, 1
        %s189 = smul.addr %s188, 64
        %s190 = scalar_lea.vmem [#allocation4], %s189
        %p191 = pneg %p43
        %p192 = pneg %p40
        %p193 = pneg %p64
        %p194 = pneg %p61
        %p195 = pneg %p85
        %p196 = pneg %p82
        %p197 = pneg %p111
        %p198 = pneg %p108
        %s199 = sand.u32 %s98, 1
        %s200 = scalar_lea.sflag [#allocation6], %s199
        %s201 = sand.u32 %s98, 1
        %s202 = smul.addr %s201, 16
        %s203 = scalar_lea.vmem [#allocation9], %s202
        %v204 = vld [vmem:[%s176] sm:$0xff]
        %v205 = vld [vmem:[%s176 + $0x8] sm:$0xff]
        %v206 = vld [vmem:[%s176 + $0x10] sm:$0xff]
        %v207 = vld [vmem:[%s176 + $0x18] sm:$0xff]
        %v208 = vld [vmem:[%s176 + $0x20] sm:$0xff]
        %v209 = vld [vmem:[%s176 + $0x28] sm:$0xff]
        %v210 = vld [vmem:[%s176 + $0x30] sm:$0xff]
        %v211 = vld [vmem:[%s176 + $0x38] sm:$0xff]
        %vm212 = vcmask 130048
        %v213 = vsel %vm212, %v204, 0.0
        %v214 = vsel %vm212, %v206, 0.0
        %v215 = vadd.f32 %v213, %v214
        %v216 = vsel %vm212, %v208, 0.0
        %v217 = vadd.f32 %v215, %v216
        %v218 = vsel %vm212, %v210, 0.0
        %v219 = vadd.f32 %v217, %v218
        %v220 = vsel %vm212, %v205, 0.0
        %v221 = vsel %vm212, %v207, 0.0
        %v222 = vadd.f32 %v220, %v221
        %v223 = vsel %vm212, %v209, 0.0
        %v224 = vadd.f32 %v222, %v223
        %v225 = vsel %vm212, %v211, 0.0
        %v226 = vadd.f32 %v224, %v225
        %v227 = vrcp.pop 4.0
        %v228 = vmul.f32 %v219, %v227
        %v229 = vmul.f32 %v226, %v227
        %v230 = vsel %vm212, %v204, -inf
        %v231 = vsel %vm212, %v206, -inf
        %v232 = vsel %vm212, %v208, -inf
        %v233 = vmax.f32 %v230, %v232
        %v234 = vsel %vm212, %v210, -inf
        %v235 = vmax.f32 %v231, %v234
        %v236 = vmax.f32 %v233, %v235
        %v237 = vsel %vm212, %v205, -inf
        %v238 = vsel %vm212, %v207, -inf
        %v239 = vsel %vm212, %v209, -inf
        %v240 = vmax.f32 %v237, %v239
        %v241 = vsel %vm212, %v211, -inf
        %v242 = vmax.f32 %v238, %v241
        %v243 = vmax.f32 %v240, %v242
        %vm244 = vcmask 179200
        %245 = vst.msk [vmem:[#allocation2] sm:$0xff] %vm244, 0.0
        %246 = vst.msk [vmem:[#allocation2 + $0x8] sm:$0xff] %vm244, 0.0
        %vm247 = vcmask 177152
        %248 = vst.msk [vmem:[#allocation2 + $0x10] sm:$0x3f] %vm247, 0.0
        %249 = vst.msk [vmem:[#allocation2 + $0x18] sm:$0xff] %vm244, 0.0
        %250 = vst.msk [vmem:[#allocation2 + $0x20] sm:$0xff] %vm244, 0.0
        %251 = vst.msk [vmem:[#allocation2 + $0x28] sm:$0x3f] %vm247, 0.0
        %254 = vrot.lane.b32.xlu0 %v228, 3
        %v255 = vpop.permute.xlu0 %254
        %256 = vrot.lane.b32.xlu0 %v229, 3
        %v257 = vpop.permute.xlu0 %256
        %vm260 = vcmask 154648
        %261 = vst.msk [vmem:[#allocation2 + $0x3] sm:$0xff] %vm260, %v255
        %262 = vst.msk [vmem:[#allocation2 + $0xb] sm:$0xff] %vm260, %v257
        %265 = vrot.lane.b32.xlu0 %v236, 3
        %v266 = vpop.permute.xlu0 %265
        %267 = vrot.lane.b32.xlu0 %v243, 3
        %v268 = vpop.permute.xlu0 %267
        %s271 = scalar_lea.vmem [#allocation2], 24
        %272 = vst.msk [vmem:[%s271 + $0x3] sm:$0xff] %vm260, %v266
        %273 = vst.msk [vmem:[%s271 + $0xb] sm:$0xff] %vm260, %v268
        %s274 = sld [smem:[#allocation3]]
        %v275 = vstv %s274
        %v276 = vadd.f32 %v275, 0.0
        %s277 = sld [smem:[#allocation8]]
        %v278 = vld [vmem:[#allocation2] sm:$0xff]
        %v279 = vld [vmem:[#allocation2 + $0x8] sm:$0xff]
        %v280 = vstv %s277
        %v281 = vmul.f32 %v278, %v280
        %v282 = vmul.f32 %v279, %v280
        %v283 = vadd.f32 %v276, %v281
        %v284 = vadd.f32 %v276, %v282
        %s285 = sld [smem:[#allocation8 + $0x1]]
        %v286 = vstv %s285
        %v287 = vmul.f32 %v278, %v286
        %v288 = vmul.f32 %v279, %v286
        %291 = vrot.lane.b32.xlu0 %v287, 127
        %v292 = vpop.permute.xlu0 %291
        %293 = vrot.lane.b32.xlu0 %v288, 127
        %v294 = vpop.permute.xlu0 %293
        %v297 = vadd.f32 %v283, %v292
        %v298 = vadd.f32 %v284, %v294
        %s299 = sld [smem:[#allocation8 + $0x2]]
        %v300 = vstv %s299
        %v301 = vmul.f32 %v278, %v300
        %v302 = vmul.f32 %v279, %v300
        %305 = vrot.lane.b32.xlu0 %v301, 126
        %v306 = vpop.permute.xlu0 %305
        %307 = vrot.lane.b32.xlu0 %v302, 126
        %v308 = vpop.permute.xlu0 %307
        %v311 = vadd.f32 %v297, %v306
        %v312 = vadd.f32 %v298, %v308
        %s313 = sld [smem:[#allocation8 + $0x3]]
        %v314 = vstv %s313
        %v315 = vmul.f32 %v278, %v314
        %v316 = vmul.f32 %v279, %v314
        %319 = vrot.lane.b32.xlu0 %v315, 125
        %v320 = vpop.permute.xlu0 %319
        %321 = vrot.lane.b32.xlu0 %v316, 125
        %v322 = vpop.permute.xlu0 %321
        %v325 = vadd.f32 %v311, %v320
        %v326 = vadd.f32 %v312, %v322
        %s327 = sld [smem:[#allocation8 + $0x4]]
        %v328 = vstv %s327
        %v329 = vmul.f32 %v278, %v328
        %v330 = vmul.f32 %v279, %v328
        %333 = vrot.lane.b32.xlu0 %v329, 124
        %v334 = vpop.permute.xlu0 %333
        %335 = vrot.lane.b32.xlu0 %v330, 124
        %v336 = vpop.permute.xlu0 %335
        %v339 = vadd.f32 %v325, %v334
        %v340 = vadd.f32 %v326, %v336
        %s341 = sld [smem:[#allocation8 + $0x5]]
        %v342 = vstv %s341
        %v343 = vmul.f32 %v278, %v342
        %v344 = vmul.f32 %v279, %v342
        %347 = vrot.lane.b32.xlu0 %v343, 123
        %v348 = vpop.permute.xlu0 %347
        %349 = vrot.lane.b32.xlu0 %v344, 123
        %v350 = vpop.permute.xlu0 %349
        %v353 = vadd.f32 %v339, %v348
        %v354 = vadd.f32 %v340, %v350
        %s355 = sld [smem:[#allocation8 + $0x6]]
        %v356 = vstv %s355
        %v357 = vmul.f32 %v278, %v356
        %v358 = vmul.f32 %v279, %v356
        %361 = vrot.lane.b32.xlu0 %v357, 122
        %v362 = vpop.permute.xlu0 %361
        %363 = vrot.lane.b32.xlu0 %v358, 122
        %v364 = vpop.permute.xlu0 %363
        %v367 = vadd.f32 %v353, %v362
        %v368 = vadd.f32 %v354, %v364
        %s369 = sld [smem:[#allocation8 + $0x7]]
        %v370 = vld [vmem:[#allocation2 + $0x1] sm:$0xff]
        %v371 = vld [vmem:[#allocation2 + $0x9] sm:$0xff]
        %v372 = vstv %s369
        %v373 = vmul.f32 %v370, %v372
        %v374 = vmul.f32 %v371, %v372
        %v375 = vadd.f32 %v367, %v373
        %v376 = vadd.f32 %v368, %v374
        %s377 = sld [smem:[#allocation8 + $0x8]]
        %v378 = vstv %s377
        %v379 = vmul.f32 %v370, %v378
        %v380 = vmul.f32 %v371, %v378
        %383 = vrot.lane.b32.xlu0 %v379, 127
        %v384 = vpop.permute.xlu0 %383
        %385 = vrot.lane.b32.xlu0 %v380, 127
        %v386 = vpop.permute.xlu0 %385
        %v389 = vadd.f32 %v375, %v384
        %v390 = vadd.f32 %v376, %v386
        %s391 = sld [smem:[#allocation8 + $0x9]]
        %v392 = vstv %s391
        %v393 = vmul.f32 %v370, %v392
        %v394 = vmul.f32 %v371, %v392
        %397 = vrot.lane.b32.xlu0 %v393, 126
        %v398 = vpop.permute.xlu0 %397
        %399 = vrot.lane.b32.xlu0 %v394, 126
        %v400 = vpop.permute.xlu0 %399
        %v403 = vadd.f32 %v389, %v398
        %v404 = vadd.f32 %v390, %v400
        %s405 = sld [smem:[#allocation8 + $0xa]]
        %v406 = vstv %s405
        %v407 = vmul.f32 %v370, %v406
        %v408 = vmul.f32 %v371, %v406
        %411 = vrot.lane.b32.xlu0 %v407, 125
        %v412 = vpop.permute.xlu0 %411
        %413 = vrot.lane.b32.xlu0 %v408, 125
        %v414 = vpop.permute.xlu0 %413
        %v417 = vadd.f32 %v403, %v412
        %v418 = vadd.f32 %v404, %v414
        %s419 = sld [smem:[#allocation8 + $0xb]]
        %v420 = vstv %s419
        %v421 = vmul.f32 %v370, %v420
        %v422 = vmul.f32 %v371, %v420
        %425 = vrot.lane.b32.xlu0 %v421, 124
        %v426 = vpop.permute.xlu0 %425
        %427 = vrot.lane.b32.xlu0 %v422, 124
        %v428 = vpop.permute.xlu0 %427
        %v431 = vadd.f32 %v417, %v426
        %v432 = vadd.f32 %v418, %v428
        %s433 = sld [smem:[#allocation8 + $0xc]]
        %v434 = vstv %s433
        %v435 = vmul.f32 %v370, %v434
        %v436 = vmul.f32 %v371, %v434
        %439 = vrot.lane.b32.xlu0 %v435, 123
        %v440 = vpop.permute.xlu0 %439
        %441 = vrot.lane.b32.xlu0 %v436, 123
        %v442 = vpop.permute.xlu0 %441
        %v445 = vadd.f32 %v431, %v440
        %v446 = vadd.f32 %v432, %v442
        %s447 = sld [smem:[#allocation8 + $0xd]]
        %v448 = vstv %s447
        %v449 = vmul.f32 %v370, %v448
        %v450 = vmul.f32 %v371, %v448
        %453 = vrot.lane.b32.xlu0 %v449, 122
        %v454 = vpop.permute.xlu0 %453
        %455 = vrot.lane.b32.xlu0 %v450, 122
        %v456 = vpop.permute.xlu0 %455
        %v459 = vadd.f32 %v445, %v454
        %v460 = vadd.f32 %v446, %v456
        %s461 = sld [smem:[#allocation8 + $0xe]]
        %v462 = vld [vmem:[#allocation2 + $0x2] sm:$0xff]
        %v463 = vld [vmem:[#allocation2 + $0xa] sm:$0xff]
        %v464 = vstv %s461
        %v465 = vmul.f32 %v462, %v464
        %v466 = vmul.f32 %v463, %v464
        %v467 = vadd.f32 %v459, %v465
        %v468 = vadd.f32 %v460, %v466
        %s469 = sld [smem:[#allocation8 + $0xf]]
        %v470 = vstv %s469
        %v471 = vmul.f32 %v462, %v470
        %v472 = vmul.f32 %v463, %v470
        %475 = vrot.lane.b32.xlu0 %v471, 127
        %v476 = vpop.permute.xlu0 %475
        %477 = vrot.lane.b32.xlu0 %v472, 127
        %v478 = vpop.permute.xlu0 %477
        %v481 = vadd.f32 %v467, %v476
        %v482 = vadd.f32 %v468, %v478
        %s483 = sld [smem:[#allocation8 + $0x10]]
        %v484 = vstv %s483
        %v485 = vmul.f32 %v462, %v484
        %v486 = vmul.f32 %v463, %v484
        %489 = vrot.lane.b32.xlu0 %v485, 126
        %v490 = vpop.permute.xlu0 %489
        %491 = vrot.lane.b32.xlu0 %v486, 126
        %v492 = vpop.permute.xlu0 %491
        %v495 = vadd.f32 %v481, %v490
        %v496 = vadd.f32 %v482, %v492
        %s497 = sld [smem:[#allocation8 + $0x11]]
        %v498 = vstv %s497
        %v499 = vmul.f32 %v462, %v498
        %v500 = vmul.f32 %v463, %v498
        %503 = vrot.lane.b32.xlu0 %v499, 125
        %v504 = vpop.permute.xlu0 %503
        %505 = vrot.lane.b32.xlu0 %v500, 125
        %v506 = vpop.permute.xlu0 %505
        %v509 = vadd.f32 %v495, %v504
        %v510 = vadd.f32 %v496, %v506
        %s511 = sld [smem:[#allocation8 + $0x12]]
        %v512 = vstv %s511
        %v513 = vmul.f32 %v462, %v512
        %v514 = vmul.f32 %v463, %v512
        %517 = vrot.lane.b32.xlu0 %v513, 124
        %v518 = vpop.permute.xlu0 %517
        %519 = vrot.lane.b32.xlu0 %v514, 124
        %v520 = vpop.permute.xlu0 %519
        %v523 = vadd.f32 %v509, %v518
        %v524 = vadd.f32 %v510, %v520
        %s525 = sld [smem:[#allocation8 + $0x13]]
        %v526 = vstv %s525
        %v527 = vmul.f32 %v462, %v526
        %v528 = vmul.f32 %v463, %v526
        %531 = vrot.lane.b32.xlu0 %v527, 123
        %v532 = vpop.permute.xlu0 %531
        %533 = vrot.lane.b32.xlu0 %v528, 123
        %v534 = vpop.permute.xlu0 %533
        %v537 = vadd.f32 %v523, %v532
        %v538 = vadd.f32 %v524, %v534
        %s539 = sld [smem:[#allocation8 + $0x14]]
        %v540 = vstv %s539
        %v541 = vmul.f32 %v462, %v540
        %v542 = vmul.f32 %v463, %v540
        %545 = vrot.lane.b32.xlu0 %v541, 122
        %v546 = vpop.permute.xlu0 %545
        %547 = vrot.lane.b32.xlu0 %v542, 122
        %v548 = vpop.permute.xlu0 %547
        %v551 = vadd.f32 %v537, %v546
        %v552 = vadd.f32 %v538, %v548
        %s553 = sld [smem:[#allocation8 + $0x15]]
        %v554 = vld [vmem:[#allocation2 + $0x3] sm:$0xff]
        %v555 = vld [vmem:[#allocation2 + $0xb] sm:$0xff]
        %v556 = vstv %s553
        %v557 = vmul.f32 %v554, %v556
        %v558 = vmul.f32 %v555, %v556
        %v559 = vadd.f32 %v551, %v557
        %v560 = vadd.f32 %v552, %v558
        %s561 = sld [smem:[#allocation8 + $0x16]]
        %v562 = vstv %s561
        %v563 = vmul.f32 %v554, %v562
        %v564 = vmul.f32 %v555, %v562
        %567 = vrot.lane.b32.xlu0 %v563, 127
        %v568 = vpop.permute.xlu0 %567
        %569 = vrot.lane.b32.xlu0 %v564, 127
        %v570 = vpop.permute.xlu0 %569
        %v573 = vadd.f32 %v559, %v568
        %v574 = vadd.f32 %v560, %v570
        %s575 = sld [smem:[#allocation8 + $0x17]]
        %v576 = vstv %s575
        %v577 = vmul.f32 %v554, %v576
        %v578 = vmul.f32 %v555, %v576
        %581 = vrot.lane.b32.xlu0 %v577, 126
        %v582 = vpop.permute.xlu0 %581
        %583 = vrot.lane.b32.xlu0 %v578, 126
        %v584 = vpop.permute.xlu0 %583
        %v587 = vadd.f32 %v573, %v582
        %v588 = vadd.f32 %v574, %v584
        %s589 = sld [smem:[#allocation8 + $0x18]]
        %v590 = vstv %s589
        %v591 = vmul.f32 %v554, %v590
        %v592 = vmul.f32 %v555, %v590
        %595 = vrot.lane.b32.xlu0 %v591, 125
        %v596 = vpop.permute.xlu0 %595
        %597 = vrot.lane.b32.xlu0 %v592, 125
        %v598 = vpop.permute.xlu0 %597
        %v601 = vadd.f32 %v587, %v596
        %v602 = vadd.f32 %v588, %v598
        %s603 = sld [smem:[#allocation8 + $0x19]]
        %v604 = vstv %s603
        %v605 = vmul.f32 %v554, %v604
        %v606 = vmul.f32 %v555, %v604
        %609 = vrot.lane.b32.xlu0 %v605, 124
        %v610 = vpop.permute.xlu0 %609
        %611 = vrot.lane.b32.xlu0 %v606, 124
        %v612 = vpop.permute.xlu0 %611
        %v615 = vadd.f32 %v601, %v610
        %v616 = vadd.f32 %v602, %v612
        %s617 = sld [smem:[#allocation8 + $0x1a]]
        %v618 = vstv %s617
        %v619 = vmul.f32 %v554, %v618
        %v620 = vmul.f32 %v555, %v618
        %623 = vrot.lane.b32.xlu0 %v619, 123
        %v624 = vpop.permute.xlu0 %623
        %625 = vrot.lane.b32.xlu0 %v620, 123
        %v626 = vpop.permute.xlu0 %625
        %v629 = vadd.f32 %v615, %v624
        %v630 = vadd.f32 %v616, %v626
        %s631 = sld [smem:[#allocation8 + $0x1b]]
        %v632 = vstv %s631
        %v633 = vmul.f32 %v554, %v632
        %v634 = vmul.f32 %v555, %v632
        %637 = vrot.lane.b32.xlu0 %v633, 122
        %v638 = vpop.permute.xlu0 %637
        %639 = vrot.lane.b32.xlu0 %v634, 122
        %v640 = vpop.permute.xlu0 %639
        %v643 = vadd.f32 %v629, %v638
        %v644 = vadd.f32 %v630, %v640
        %s645 = sld [smem:[#allocation8 + $0x1c]]
        %v646 = vld [vmem:[#allocation2 + $0x4] sm:$0xff]
        %v647 = vld [vmem:[#allocation2 + $0xc] sm:$0xff]
        %v648 = vstv %s645
        %v649 = vmul.f32 %v646, %v648
        %v650 = vmul.f32 %v647, %v648
        %v651 = vadd.f32 %v643, %v649
        %v652 = vadd.f32 %v644, %v650
        %s653 = sld [smem:[#allocation8 + $0x1d]]
        %v654 = vstv %s653
        %v655 = vmul.f32 %v646, %v654
        %v656 = vmul.f32 %v647, %v654
        %659 = vrot.lane.b32.xlu0 %v655, 127
        %v660 = vpop.permute.xlu0 %659
        %661 = vrot.lane.b32.xlu0 %v656, 127
        %v662 = vpop.permute.xlu0 %661
        %v665 = vadd.f32 %v651, %v660
        %v666 = vadd.f32 %v652, %v662
        %s667 = sld [smem:[#allocation8 + $0x1e]]
        %v668 = vstv %s667
        %v669 = vmul.f32 %v646, %v668
        %v670 = vmul.f32 %v647, %v668
        %673 = vrot.lane.b32.xlu0 %v669, 126
        %v674 = vpop.permute.xlu0 %673
        %675 = vrot.lane.b32.xlu0 %v670, 126
        %v676 = vpop.permute.xlu0 %675
        %v679 = vadd.f32 %v665, %v674
        %v680 = vadd.f32 %v666, %v676
        %s681 = sld [smem:[#allocation8 + $0x1f]]
        %v682 = vstv %s681
        %v683 = vmul.f32 %v646, %v682
        %v684 = vmul.f32 %v647, %v682
        %687 = vrot.lane.b32.xlu0 %v683, 125
        %v688 = vpop.permute.xlu0 %687
        %689 = vrot.lane.b32.xlu0 %v684, 125
        %v690 = vpop.permute.xlu0 %689
        %v693 = vadd.f32 %v679, %v688
        %v694 = vadd.f32 %v680, %v690
        %s695 = sld [smem:[#allocation8 + $0x20]]
        %v696 = vstv %s695
        %v697 = vmul.f32 %v646, %v696
        %v698 = vmul.f32 %v647, %v696
        %701 = vrot.lane.b32.xlu0 %v697, 124
        %v702 = vpop.permute.xlu0 %701
        %703 = vrot.lane.b32.xlu0 %v698, 124
        %v704 = vpop.permute.xlu0 %703
        %v707 = vadd.f32 %v693, %v702
        %v708 = vadd.f32 %v694, %v704
        %s709 = sld [smem:[#allocation8 + $0x21]]
        %v710 = vstv %s709
        %v711 = vmul.f32 %v646, %v710
        %v712 = vmul.f32 %v647, %v710
        %715 = vrot.lane.b32.xlu0 %v711, 123
        %v716 = vpop.permute.xlu0 %715
        %717 = vrot.lane.b32.xlu0 %v712, 123
        %v718 = vpop.permute.xlu0 %717
        %v721 = vadd.f32 %v707, %v716
        %v722 = vadd.f32 %v708, %v718
        %s723 = sld [smem:[#allocation8 + $0x22]]
        %v724 = vstv %s723
        %v725 = vmul.f32 %v646, %v724
        %v726 = vmul.f32 %v647, %v724
        %729 = vrot.lane.b32.xlu0 %v725, 122
        %v730 = vpop.permute.xlu0 %729
        %731 = vrot.lane.b32.xlu0 %v726, 122
        %v732 = vpop.permute.xlu0 %731
        %v735 = vadd.f32 %v721, %v730
        %v736 = vadd.f32 %v722, %v732
        %s737 = sld [smem:[#allocation8 + $0x23]]
        %v738 = vld [vmem:[#allocation2 + $0x5] sm:$0xff]
        %v739 = vld [vmem:[#allocation2 + $0xd] sm:$0xff]
        %v740 = vstv %s737
        %v741 = vmul.f32 %v738, %v740
        %v742 = vmul.f32 %v739, %v740
        %v743 = vadd.f32 %v735, %v741
        %v744 = vadd.f32 %v736, %v742
        %s745 = sld [smem:[#allocation8 + $0x24]]
        %v746 = vstv %s745
        %v747 = vmul.f32 %v738, %v746
        %v748 = vmul.f32 %v739, %v746
        %751 = vrot.lane.b32.xlu0 %v747, 127
        %v752 = vpop.permute.xlu0 %751
        %753 = vrot.lane.b32.xlu0 %v748, 127
        %v754 = vpop.permute.xlu0 %753
        %v757 = vadd.f32 %v743, %v752
        %v758 = vadd.f32 %v744, %v754
        %s759 = sld [smem:[#allocation8 + $0x25]]
        %v760 = vstv %s759
        %v761 = vmul.f32 %v738, %v760
        %v762 = vmul.f32 %v739, %v760
        %765 = vrot.lane.b32.xlu0 %v761, 126
        %v766 = vpop.permute.xlu0 %765
        %767 = vrot.lane.b32.xlu0 %v762, 126
        %v768 = vpop.permute.xlu0 %767
        %v771 = vadd.f32 %v757, %v766
        %v772 = vadd.f32 %v758, %v768
        %s773 = sld [smem:[#allocation8 + $0x26]]
        %v774 = vstv %s773
        %v775 = vmul.f32 %v738, %v774
        %v776 = vmul.f32 %v739, %v774
        %779 = vrot.lane.b32.xlu0 %v775, 125
        %v780 = vpop.permute.xlu0 %779
        %781 = vrot.lane.b32.xlu0 %v776, 125
        %v782 = vpop.permute.xlu0 %781
        %v785 = vadd.f32 %v771, %v780
        %v786 = vadd.f32 %v772, %v782
        %s787 = sld [smem:[#allocation8 + $0x27]]
        %v788 = vstv %s787
        %v789 = vmul.f32 %v738, %v788
        %v790 = vmul.f32 %v739, %v788
        %793 = vrot.lane.b32.xlu0 %v789, 124
        %v794 = vpop.permute.xlu0 %793
        %795 = vrot.lane.b32.xlu0 %v790, 124
        %v796 = vpop.permute.xlu0 %795
        %v799 = vadd.f32 %v785, %v794
        %v800 = vadd.f32 %v786, %v796
        %s801 = sld [smem:[#allocation8 + $0x28]]
        %v802 = vstv %s801
        %v803 = vmul.f32 %v738, %v802
        %v804 = vmul.f32 %v739, %v802
        %807 = vrot.lane.b32.xlu0 %v803, 123
        %v808 = vpop.permute.xlu0 %807
        %809 = vrot.lane.b32.xlu0 %v804, 123
        %v810 = vpop.permute.xlu0 %809
        %v813 = vadd.f32 %v799, %v808
        %v814 = vadd.f32 %v800, %v810
        %s815 = sld [smem:[#allocation8 + $0x29]]
        %v816 = vstv %s815
        %v817 = vmul.f32 %v738, %v816
        %v818 = vmul.f32 %v739, %v816
        %821 = vrot.lane.b32.xlu0 %v817, 122
        %v822 = vpop.permute.xlu0 %821
        %823 = vrot.lane.b32.xlu0 %v818, 122
        %v824 = vpop.permute.xlu0 %823
        %v827 = vadd.f32 %v813, %v822
        %v828 = vadd.f32 %v814, %v824
        %s829 = sld [smem:[#allocation8 + $0x2a]]
        %v830 = vld [vmem:[#allocation2 + $0x6] sm:$0xff]
        %v831 = vld [vmem:[#allocation2 + $0xe] sm:$0xff]
        %v832 = vstv %s829
        %v833 = vmul.f32 %v830, %v832
        %v834 = vmul.f32 %v831, %v832
        %v835 = vadd.f32 %v827, %v833
        %v836 = vadd.f32 %v828, %v834
        %s837 = sld [smem:[#allocation8 + $0x2b]]
        %v838 = vstv %s837
        %v839 = vmul.f32 %v830, %v838
        %v840 = vmul.f32 %v831, %v838
        %843 = vrot.lane.b32.xlu0 %v839, 127
        %v844 = vpop.permute.xlu0 %843
        %845 = vrot.lane.b32.xlu0 %v840, 127
        %v846 = vpop.permute.xlu0 %845
        %v849 = vadd.f32 %v835, %v844
        %v850 = vadd.f32 %v836, %v846
        %s851 = sld [smem:[#allocation8 + $0x2c]]
        %v852 = vstv %s851
        %v853 = vmul.f32 %v830, %v852
        %v854 = vmul.f32 %v831, %v852
        %857 = vrot.lane.b32.xlu0 %v853, 126
        %v858 = vpop.permute.xlu0 %857
        %859 = vrot.lane.b32.xlu0 %v854, 126
        %v860 = vpop.permute.xlu0 %859
        %v863 = vadd.f32 %v849, %v858
        %v864 = vadd.f32 %v850, %v860
        %s865 = sld [smem:[#allocation8 + $0x2d]]
        %v866 = vstv %s865
        %v867 = vmul.f32 %v830, %v866
        %v868 = vmul.f32 %v831, %v866
        %871 = vrot.lane.b32.xlu0 %v867, 125
        %v872 = vpop.permute.xlu0 %871
        %873 = vrot.lane.b32.xlu0 %v868, 125
        %v874 = vpop.permute.xlu0 %873
        %v877 = vadd.f32 %v863, %v872
        %v878 = vadd.f32 %v864, %v874
        %s879 = sld [smem:[#allocation8 + $0x2e]]
        %v880 = vstv %s879
        %v881 = vmul.f32 %v830, %v880
        %v882 = vmul.f32 %v831, %v880
        %885 = vrot.lane.b32.xlu0 %v881, 124
        %v886 = vpop.permute.xlu0 %885
        %887 = vrot.lane.b32.xlu0 %v882, 124
        %v888 = vpop.permute.xlu0 %887
        %v891 = vadd.f32 %v877, %v886
        %v892 = vadd.f32 %v878, %v888
        %s893 = sld [smem:[#allocation8 + $0x2f]]
        %v894 = vstv %s893
        %v895 = vmul.f32 %v830, %v894
        %v896 = vmul.f32 %v831, %v894
        %899 = vrot.lane.b32.xlu0 %v895, 123
        %v900 = vpop.permute.xlu0 %899
        %901 = vrot.lane.b32.xlu0 %v896, 123
        %v902 = vpop.permute.xlu0 %901
        %v905 = vadd.f32 %v891, %v900
        %v906 = vadd.f32 %v892, %v902
        %s907 = sld [smem:[#allocation8 + $0x30]]
        %v908 = vstv %s907
        %v909 = vmul.f32 %v830, %v908
        %v910 = vmul.f32 %v831, %v908
        %913 = vrot.lane.b32.xlu0 %v909, 122
        %v914 = vpop.permute.xlu0 %913
        %915 = vrot.lane.b32.xlu0 %v910, 122
        %v916 = vpop.permute.xlu0 %915
        %v919 = vadd.f32 %v905, %v914
        %v920 = vadd.f32 %v906, %v916
        %s921 = sld [smem:[#allocation8 + $0x31]]
        %v922 = vld [vmem:[%s271] sm:$0xff]
        %v923 = vld [vmem:[%s271 + $0x8] sm:$0xff]
        %v924 = vstv %s921
        %v925 = vmul.f32 %v922, %v924
        %v926 = vmul.f32 %v923, %v924
        %v927 = vadd.f32 %v919, %v925
        %v928 = vadd.f32 %v920, %v926
        %s929 = sld [smem:[#allocation8 + $0x32]]
        %v930 = vstv %s929
        %v931 = vmul.f32 %v922, %v930
        %v932 = vmul.f32 %v923, %v930
        %935 = vrot.lane.b32.xlu0 %v931, 127
        %v936 = vpop.permute.xlu0 %935
        %937 = vrot.lane.b32.xlu0 %v932, 127
        %v938 = vpop.permute.xlu0 %937
        %v941 = vadd.f32 %v927, %v936
        %v942 = vadd.f32 %v928, %v938
        %s943 = sld [smem:[#allocation8 + $0x33]]
        %v944 = vstv %s943
        %v945 = vmul.f32 %v922, %v944
        %v946 = vmul.f32 %v923, %v944
        %949 = vrot.lane.b32.xlu0 %v945, 126
        %v950 = vpop.permute.xlu0 %949
        %951 = vrot.lane.b32.xlu0 %v946, 126
        %v952 = vpop.permute.xlu0 %951
        %v955 = vadd.f32 %v941, %v950
        %v956 = vadd.f32 %v942, %v952
        %s957 = sld [smem:[#allocation8 + $0x34]]
        %v958 = vstv %s957
        %v959 = vmul.f32 %v922, %v958
        %v960 = vmul.f32 %v923, %v958
        %963 = vrot.lane.b32.xlu0 %v959, 125
        %v964 = vpop.permute.xlu0 %963
        %965 = vrot.lane.b32.xlu0 %v960, 125
        %v966 = vpop.permute.xlu0 %965
        %v969 = vadd.f32 %v955, %v964
        %v970 = vadd.f32 %v956, %v966
        %s971 = sld [smem:[#allocation8 + $0x35]]
        %v972 = vstv %s971
        %v973 = vmul.f32 %v922, %v972
        %v974 = vmul.f32 %v923, %v972
        %977 = vrot.lane.b32.xlu0 %v973, 124
        %v978 = vpop.permute.xlu0 %977
        %979 = vrot.lane.b32.xlu0 %v974, 124
        %v980 = vpop.permute.xlu0 %979
        %v983 = vadd.f32 %v969, %v978
        %v984 = vadd.f32 %v970, %v980
        %s985 = sld [smem:[#allocation8 + $0x36]]
        %v986 = vstv %s985
        %v987 = vmul.f32 %v922, %v986
        %v988 = vmul.f32 %v923, %v986
        %991 = vrot.lane.b32.xlu0 %v987, 123
        %v992 = vpop.permute.xlu0 %991
        %993 = vrot.lane.b32.xlu0 %v988, 123
        %v994 = vpop.permute.xlu0 %993
        %v997 = vadd.f32 %v983, %v992
        %v998 = vadd.f32 %v984, %v994
        %s999 = sld [smem:[#allocation8 + $0x37]]
        %v1000 = vstv %s999
        %v1001 = vmul.f32 %v922, %v1000
        %v1002 = vmul.f32 %v923, %v1000
        %1005 = vrot.lane.b32.xlu0 %v1001, 122
        %v1006 = vpop.permute.xlu0 %1005
        %1007 = vrot.lane.b32.xlu0 %v1002, 122
        %v1008 = vpop.permute.xlu0 %1007
        %v1011 = vadd.f32 %v997, %v1006
        %v1012 = vadd.f32 %v998, %v1008
        %s1013 = sld [smem:[#allocation8 + $0x38]]
        %v1014 = vld [vmem:[%s271 + $0x1] sm:$0xff]
        %v1015 = vld [vmem:[%s271 + $0x9] sm:$0xff]
        %v1016 = vstv %s1013
        %v1017 = vmul.f32 %v1014, %v1016
        %v1018 = vmul.f32 %v1015, %v1016
        %v1019 = vadd.f32 %v1011, %v1017
        %v1020 = vadd.f32 %v1012, %v1018
        %s1021 = sld [smem:[#allocation8 + $0x39]]
        %v1022 = vstv %s1021
        %v1023 = vmul.f32 %v1014, %v1022
        %v1024 = vmul.f32 %v1015, %v1022
        %1027 = vrot.lane.b32.xlu0 %v1023, 127
        %v1028 = vpop.permute.xlu0 %1027
        %1029 = vrot.lane.b32.xlu0 %v1024, 127
        %v1030 = vpop.permute.xlu0 %1029
        %v1033 = vadd.f32 %v1019, %v1028
        %v1034 = vadd.f32 %v1020, %v1030
        %s1035 = sld [smem:[#allocation8 + $0x3a]]
        %v1036 = vstv %s1035
        %v1037 = vmul.f32 %v1014, %v1036
        %v1038 = vmul.f32 %v1015, %v1036
        %1041 = vrot.lane.b32.xlu0 %v1037, 126
        %v1042 = vpop.permute.xlu0 %1041
        %1043 = vrot.lane.b32.xlu0 %v1038, 126
        %v1044 = vpop.permute.xlu0 %1043
        %v1047 = vadd.f32 %v1033, %v1042
        %v1048 = vadd.f32 %v1034, %v1044
        %s1049 = sld [smem:[#allocation8 + $0x3b]]
        %v1050 = vstv %s1049
        %v1051 = vmul.f32 %v1014, %v1050
        %v1052 = vmul.f32 %v1015, %v1050
        %1055 = vrot.lane.b32.xlu0 %v1051, 125
        %v1056 = vpop.permute.xlu0 %1055
        %1057 = vrot.lane.b32.xlu0 %v1052, 125
        %v1058 = vpop.permute.xlu0 %1057
        %v1061 = vadd.f32 %v1047, %v1056
        %v1062 = vadd.f32 %v1048, %v1058
        %s1063 = sld [smem:[#allocation8 + $0x3c]]
        %v1064 = vstv %s1063
        %v1065 = vmul.f32 %v1014, %v1064
        %v1066 = vmul.f32 %v1015, %v1064
        %1069 = vrot.lane.b32.xlu0 %v1065, 124
        %v1070 = vpop.permute.xlu0 %1069
        %1071 = vrot.lane.b32.xlu0 %v1066, 124
        %v1072 = vpop.permute.xlu0 %1071
        %v1075 = vadd.f32 %v1061, %v1070
        %v1076 = vadd.f32 %v1062, %v1072
        %s1077 = sld [smem:[#allocation8 + $0x3d]]
        %v1078 = vstv %s1077
        %v1079 = vmul.f32 %v1014, %v1078
        %v1080 = vmul.f32 %v1015, %v1078
        %1083 = vrot.lane.b32.xlu0 %v1079, 123
        %v1084 = vpop.permute.xlu0 %1083
        %1085 = vrot.lane.b32.xlu0 %v1080, 123
        %v1086 = vpop.permute.xlu0 %1085
        %v1089 = vadd.f32 %v1075, %v1084
        %v1090 = vadd.f32 %v1076, %v1086
        %s1091 = sld [smem:[#allocation8 + $0x3e]]
        %v1092 = vstv %s1091
        %v1093 = vmul.f32 %v1014, %v1092
        %v1094 = vmul.f32 %v1015, %v1092
        %1097 = vrot.lane.b32.xlu0 %v1093, 122
        %v1098 = vpop.permute.xlu0 %1097
        %1099 = vrot.lane.b32.xlu0 %v1094, 122
        %v1100 = vpop.permute.xlu0 %1099
        %v1103 = vadd.f32 %v1089, %v1098
        %v1104 = vadd.f32 %v1090, %v1100
        %s1105 = sld [smem:[#allocation8 + $0x3f]]
        %v1106 = vld [vmem:[%s271 + $0x2] sm:$0xff]
        %v1107 = vld [vmem:[%s271 + $0xa] sm:$0xff]
        %v1108 = vstv %s1105
        %v1109 = vmul.f32 %v1106, %v1108
        %v1110 = vmul.f32 %v1107, %v1108
        %v1111 = vadd.f32 %v1103, %v1109
        %v1112 = vadd.f32 %v1104, %v1110
        %s1113 = sld [smem:[#allocation8 + $0x40]]
        %v1114 = vstv %s1113
        %v1115 = vmul.f32 %v1106, %v1114
        %v1116 = vmul.f32 %v1107, %v1114
        %1119 = vrot.lane.b32.xlu0 %v1115, 127
        %v1120 = vpop.permute.xlu0 %1119
        %1121 = vrot.lane.b32.xlu0 %v1116, 127
        %v1122 = vpop.permute.xlu0 %1121
        %v1125 = vadd.f32 %v1111, %v1120
        %v1126 = vadd.f32 %v1112, %v1122
        %s1127 = sld [smem:[#allocation8 + $0x41]]
        %v1128 = vstv %s1127
        %v1129 = vmul.f32 %v1106, %v1128
        %v1130 = vmul.f32 %v1107, %v1128
        %1133 = vrot.lane.b32.xlu0 %v1129, 126
        %v1134 = vpop.permute.xlu0 %1133
        %1135 = vrot.lane.b32.xlu0 %v1130, 126
        %v1136 = vpop.permute.xlu0 %1135
        %v1139 = vadd.f32 %v1125, %v1134
        %v1140 = vadd.f32 %v1126, %v1136
        %s1141 = sld [smem:[#allocation8 + $0x42]]
        %v1142 = vstv %s1141
        %v1143 = vmul.f32 %v1106, %v1142
        %v1144 = vmul.f32 %v1107, %v1142
        %1147 = vrot.lane.b32.xlu0 %v1143, 125
        %v1148 = vpop.permute.xlu0 %1147
        %1149 = vrot.lane.b32.xlu0 %v1144, 125
        %v1150 = vpop.permute.xlu0 %1149
        %v1153 = vadd.f32 %v1139, %v1148
        %v1154 = vadd.f32 %v1140, %v1150
        %s1155 = sld [smem:[#allocation8 + $0x43]]
        %v1156 = vstv %s1155
        %v1157 = vmul.f32 %v1106, %v1156
        %v1158 = vmul.f32 %v1107, %v1156
        %1161 = vrot.lane.b32.xlu0 %v1157, 124
        %v1162 = vpop.permute.xlu0 %1161
        %1163 = vrot.lane.b32.xlu0 %v1158, 124
        %v1164 = vpop.permute.xlu0 %1163
        %v1167 = vadd.f32 %v1153, %v1162
        %v1168 = vadd.f32 %v1154, %v1164
        %s1169 = sld [smem:[#allocation8 + $0x44]]
        %v1170 = vstv %s1169
        %v1171 = vmul.f32 %v1106, %v1170
        %v1172 = vmul.f32 %v1107, %v1170
        %1175 = vrot.lane.b32.xlu0 %v1171, 123
        %v1176 = vpop.permute.xlu0 %1175
        %1177 = vrot.lane.b32.xlu0 %v1172, 123
        %v1178 = vpop.permute.xlu0 %1177
        %v1181 = vadd.f32 %v1167, %v1176
        %v1182 = vadd.f32 %v1168, %v1178
        %s1183 = sld [smem:[#allocation8 + $0x45]]
        %v1184 = vstv %s1183
        %v1185 = vmul.f32 %v1106, %v1184
        %v1186 = vmul.f32 %v1107, %v1184
        %1189 = vrot.lane.b32.xlu0 %v1185, 122
        %v1190 = vpop.permute.xlu0 %1189
        %1191 = vrot.lane.b32.xlu0 %v1186, 122
        %v1192 = vpop.permute.xlu0 %1191
        %v1195 = vadd.f32 %v1181, %v1190
        %v1196 = vadd.f32 %v1182, %v1192
        %s1197 = sld [smem:[#allocation8 + $0x46]]
        %v1198 = vld [vmem:[%s271 + $0x3] sm:$0xff]
        %v1199 = vld [vmem:[%s271 + $0xb] sm:$0xff]
        %v1200 = vstv %s1197
        %v1201 = vmul.f32 %v1198, %v1200
        %v1202 = vmul.f32 %v1199, %v1200
        %v1203 = vadd.f32 %v1195, %v1201
        %v1204 = vadd.f32 %v1196, %v1202
        %s1205 = sld [smem:[#allocation8 + $0x47]]
        %v1206 = vstv %s1205
        %v1207 = vmul.f32 %v1198, %v1206
        %v1208 = vmul.f32 %v1199, %v1206
        %1211 = vrot.lane.b32.xlu0 %v1207, 127
        %v1212 = vpop.permute.xlu0 %1211
        %1213 = vrot.lane.b32.xlu0 %v1208, 127
        %v1214 = vpop.permute.xlu0 %1213
        %v1217 = vadd.f32 %v1203, %v1212
        %v1218 = vadd.f32 %v1204, %v1214
        %s1219 = sld [smem:[#allocation8 + $0x48]]
        %v1220 = vstv %s1219
        %v1221 = vmul.f32 %v1198, %v1220
        %v1222 = vmul.f32 %v1199, %v1220
        %1225 = vrot.lane.b32.xlu0 %v1221, 126
        %v1226 = vpop.permute.xlu0 %1225
        %1227 = vrot.lane.b32.xlu0 %v1222, 126
        %v1228 = vpop.permute.xlu0 %1227
        %v1231 = vadd.f32 %v1217, %v1226
        %v1232 = vadd.f32 %v1218, %v1228
        %s1233 = sld [smem:[#allocation8 + $0x49]]
        %v1234 = vstv %s1233
        %v1235 = vmul.f32 %v1198, %v1234
        %v1236 = vmul.f32 %v1199, %v1234
        %1239 = vrot.lane.b32.xlu0 %v1235, 125
        %v1240 = vpop.permute.xlu0 %1239
        %1241 = vrot.lane.b32.xlu0 %v1236, 125
        %v1242 = vpop.permute.xlu0 %1241
        %v1245 = vadd.f32 %v1231, %v1240
        %v1246 = vadd.f32 %v1232, %v1242
        %s1247 = sld [smem:[#allocation8 + $0x4a]]
        %v1248 = vstv %s1247
        %v1249 = vmul.f32 %v1198, %v1248
        %v1250 = vmul.f32 %v1199, %v1248
        %1253 = vrot.lane.b32.xlu0 %v1249, 124
        %v1254 = vpop.permute.xlu0 %1253
        %1255 = vrot.lane.b32.xlu0 %v1250, 124
        %v1256 = vpop.permute.xlu0 %1255
        %v1259 = vadd.f32 %v1245, %v1254
        %v1260 = vadd.f32 %v1246, %v1256
        %s1261 = sld [smem:[#allocation8 + $0x4b]]
        %v1262 = vstv %s1261
        %v1263 = vmul.f32 %v1198, %v1262
        %v1264 = vmul.f32 %v1199, %v1262
        %1267 = vrot.lane.b32.xlu0 %v1263, 123
        %v1268 = vpop.permute.xlu0 %1267
        %1269 = vrot.lane.b32.xlu0 %v1264, 123
        %v1270 = vpop.permute.xlu0 %1269
        %v1273 = vadd.f32 %v1259, %v1268
        %v1274 = vadd.f32 %v1260, %v1270
        %s1275 = sld [smem:[#allocation8 + $0x4c]]
        %v1276 = vstv %s1275
        %v1277 = vmul.f32 %v1198, %v1276
        %v1278 = vmul.f32 %v1199, %v1276
        %1281 = vrot.lane.b32.xlu0 %v1277, 122
        %v1282 = vpop.permute.xlu0 %1281
        %1283 = vrot.lane.b32.xlu0 %v1278, 122
        %v1284 = vpop.permute.xlu0 %1283
        %v1287 = vadd.f32 %v1273, %v1282
        %v1288 = vadd.f32 %v1274, %v1284
        %s1289 = sld [smem:[#allocation8 + $0x4d]]
        %v1290 = vld [vmem:[%s271 + $0x4] sm:$0xff]
        %v1291 = vld [vmem:[%s271 + $0xc] sm:$0xff]
        %v1292 = vstv %s1289
        %v1293 = vmul.f32 %v1290, %v1292
        %v1294 = vmul.f32 %v1291, %v1292
        %v1295 = vadd.f32 %v1287, %v1293
        %v1296 = vadd.f32 %v1288, %v1294
        %s1297 = sld [smem:[#allocation8 + $0x4e]]
        %v1298 = vstv %s1297
        %v1299 = vmul.f32 %v1290, %v1298
        %v1300 = vmul.f32 %v1291, %v1298
        %1303 = vrot.lane.b32.xlu0 %v1299, 127
        %v1304 = vpop.permute.xlu0 %1303
        %1305 = vrot.lane.b32.xlu0 %v1300, 127
        %v1306 = vpop.permute.xlu0 %1305
        %v1309 = vadd.f32 %v1295, %v1304
        %v1310 = vadd.f32 %v1296, %v1306
        %s1311 = sld [smem:[#allocation8 + $0x4f]]
        %v1312 = vstv %s1311
        %v1313 = vmul.f32 %v1290, %v1312
        %v1314 = vmul.f32 %v1291, %v1312
        %1317 = vrot.lane.b32.xlu0 %v1313, 126
        %v1318 = vpop.permute.xlu0 %1317
        %1319 = vrot.lane.b32.xlu0 %v1314, 126
        %v1320 = vpop.permute.xlu0 %1319
        %v1323 = vadd.f32 %v1309, %v1318
        %v1324 = vadd.f32 %v1310, %v1320
        %s1325 = sld [smem:[#allocation8 + $0x50]]
        %v1326 = vstv %s1325
        %v1327 = vmul.f32 %v1290, %v1326
        %v1328 = vmul.f32 %v1291, %v1326
        %1331 = vrot.lane.b32.xlu0 %v1327, 125
        %v1332 = vpop.permute.xlu0 %1331
        %1333 = vrot.lane.b32.xlu0 %v1328, 125
        %v1334 = vpop.permute.xlu0 %1333
        %v1337 = vadd.f32 %v1323, %v1332
        %v1338 = vadd.f32 %v1324, %v1334
        %s1339 = sld [smem:[#allocation8 + $0x51]]
        %v1340 = vstv %s1339
        %v1341 = vmul.f32 %v1290, %v1340
        %v1342 = vmul.f32 %v1291, %v1340
        %1345 = vrot.lane.b32.xlu0 %v1341, 124
        %v1346 = vpop.permute.xlu0 %1345
        %1347 = vrot.lane.b32.xlu0 %v1342, 124
        %v1348 = vpop.permute.xlu0 %1347
        %v1351 = vadd.f32 %v1337, %v1346
        %v1352 = vadd.f32 %v1338, %v1348
        %s1353 = sld [smem:[#allocation8 + $0x52]]
        %v1354 = vstv %s1353
        %v1355 = vmul.f32 %v1290, %v1354
        %v1356 = vmul.f32 %v1291, %v1354
        %1359 = vrot.lane.b32.xlu0 %v1355, 123
        %v1360 = vpop.permute.xlu0 %1359
        %1361 = vrot.lane.b32.xlu0 %v1356, 123
        %v1362 = vpop.permute.xlu0 %1361
        %v1365 = vadd.f32 %v1351, %v1360
        %v1366 = vadd.f32 %v1352, %v1362
        %s1367 = sld [smem:[#allocation8 + $0x53]]
        %v1368 = vstv %s1367
        %v1369 = vmul.f32 %v1290, %v1368
        %v1370 = vmul.f32 %v1291, %v1368
        %1373 = vrot.lane.b32.xlu0 %v1369, 122
        %v1374 = vpop.permute.xlu0 %1373
        %1375 = vrot.lane.b32.xlu0 %v1370, 122
        %v1376 = vpop.permute.xlu0 %1375
        %v1379 = vadd.f32 %v1365, %v1374
        %v1380 = vadd.f32 %v1366, %v1376
        %s1381 = sld [smem:[#allocation8 + $0x54]]
        %v1382 = vld [vmem:[%s271 + $0x5] sm:$0xff]
        %v1383 = vld [vmem:[%s271 + $0xd] sm:$0xff]
        %v1384 = vstv %s1381
        %v1385 = vmul.f32 %v1382, %v1384
        %v1386 = vmul.f32 %v1383, %v1384
        %v1387 = vadd.f32 %v1379, %v1385
        %v1388 = vadd.f32 %v1380, %v1386
        %s1389 = sld [smem:[#allocation8 + $0x55]]
        %v1390 = vstv %s1389
        %v1391 = vmul.f32 %v1382, %v1390
        %v1392 = vmul.f32 %v1383, %v1390
        %1395 = vrot.lane.b32.xlu0 %v1391, 127
        %v1396 = vpop.permute.xlu0 %1395
        %1397 = vrot.lane.b32.xlu0 %v1392, 127
        %v1398 = vpop.permute.xlu0 %1397
        %v1401 = vadd.f32 %v1387, %v1396
        %v1402 = vadd.f32 %v1388, %v1398
        %s1403 = sld [smem:[#allocation8 + $0x56]]
        %v1404 = vstv %s1403
        %v1405 = vmul.f32 %v1382, %v1404
        %v1406 = vmul.f32 %v1383, %v1404
        %1409 = vrot.lane.b32.xlu0 %v1405, 126
        %v1410 = vpop.permute.xlu0 %1409
        %1411 = vrot.lane.b32.xlu0 %v1406, 126
        %v1412 = vpop.permute.xlu0 %1411
        %v1415 = vadd.f32 %v1401, %v1410
        %v1416 = vadd.f32 %v1402, %v1412
        %s1417 = sld [smem:[#allocation8 + $0x57]]
        %v1418 = vstv %s1417
        %v1419 = vmul.f32 %v1382, %v1418
        %v1420 = vmul.f32 %v1383, %v1418
        %1423 = vrot.lane.b32.xlu0 %v1419, 125
        %v1424 = vpop.permute.xlu0 %1423
        %1425 = vrot.lane.b32.xlu0 %v1420, 125
        %v1426 = vpop.permute.xlu0 %1425
        %v1429 = vadd.f32 %v1415, %v1424
        %v1430 = vadd.f32 %v1416, %v1426
        %s1431 = sld [smem:[#allocation8 + $0x58]]
        %v1432 = vstv %s1431
        %v1433 = vmul.f32 %v1382, %v1432
        %v1434 = vmul.f32 %v1383, %v1432
        %1437 = vrot.lane.b32.xlu0 %v1433, 124
        %v1438 = vpop.permute.xlu0 %1437
        %1439 = vrot.lane.b32.xlu0 %v1434, 124
        %v1440 = vpop.permute.xlu0 %1439
        %v1443 = vadd.f32 %v1429, %v1438
        %v1444 = vadd.f32 %v1430, %v1440
        %s1445 = sld [smem:[#allocation8 + $0x59]]
        %v1446 = vstv %s1445
        %v1447 = vmul.f32 %v1382, %v1446
        %v1448 = vmul.f32 %v1383, %v1446
        %1451 = vrot.lane.b32.xlu0 %v1447, 123
        %v1452 = vpop.permute.xlu0 %1451
        %1453 = vrot.lane.b32.xlu0 %v1448, 123
        %v1454 = vpop.permute.xlu0 %1453
        %v1457 = vadd.f32 %v1443, %v1452
        %v1458 = vadd.f32 %v1444, %v1454
        %s1459 = sld [smem:[#allocation8 + $0x5a]]
        %v1460 = vstv %s1459
        %v1461 = vmul.f32 %v1382, %v1460
        %v1462 = vmul.f32 %v1383, %v1460
        %1465 = vrot.lane.b32.xlu0 %v1461, 122
        %v1466 = vpop.permute.xlu0 %1465
        %1467 = vrot.lane.b32.xlu0 %v1462, 122
        %v1468 = vpop.permute.xlu0 %1467
        %v1471 = vadd.f32 %v1457, %v1466
        %v1472 = vadd.f32 %v1458, %v1468
        %s1473 = sld [smem:[#allocation8 + $0x5b]]
        %v1474 = vld [vmem:[%s271 + $0x6] sm:$0xff]
        %v1475 = vld [vmem:[%s271 + $0xe] sm:$0xff]
        %v1476 = vstv %s1473
        %v1477 = vmul.f32 %v1474, %v1476
        %v1478 = vmul.f32 %v1475, %v1476
        %v1479 = vadd.f32 %v1471, %v1477
        %v1480 = vadd.f32 %v1472, %v1478
        %s1481 = sld [smem:[#allocation8 + $0x5c]]
        %v1482 = vstv %s1481
        %v1483 = vmul.f32 %v1474, %v1482
        %v1484 = vmul.f32 %v1475, %v1482
        %1487 = vrot.lane.b32.xlu0 %v1483, 127
        %v1488 = vpop.permute.xlu0 %1487
        %1489 = vrot.lane.b32.xlu0 %v1484, 127
        %v1490 = vpop.permute.xlu0 %1489
        %v1493 = vadd.f32 %v1479, %v1488
        %v1494 = vadd.f32 %v1480, %v1490
        %s1495 = sld [smem:[#allocation8 + $0x5d]]
        %v1496 = vstv %s1495
        %v1497 = vmul.f32 %v1474, %v1496
        %v1498 = vmul.f32 %v1475, %v1496
        %1501 = vrot.lane.b32.xlu0 %v1497, 126
        %v1502 = vpop.permute.xlu0 %1501
        %1503 = vrot.lane.b32.xlu0 %v1498, 126
        %v1504 = vpop.permute.xlu0 %1503
        %v1507 = vadd.f32 %v1493, %v1502
        %v1508 = vadd.f32 %v1494, %v1504
        %s1509 = sld [smem:[#allocation8 + $0x5e]]
        %v1510 = vstv %s1509
        %v1511 = vmul.f32 %v1474, %v1510
        %v1512 = vmul.f32 %v1475, %v1510
        %1515 = vrot.lane.b32.xlu0 %v1511, 125
        %v1516 = vpop.permute.xlu0 %1515
        %1517 = vrot.lane.b32.xlu0 %v1512, 125
        %v1518 = vpop.permute.xlu0 %1517
        %v1521 = vadd.f32 %v1507, %v1516
        %v1522 = vadd.f32 %v1508, %v1518
        %s1523 = sld [smem:[#allocation8 + $0x5f]]
        %v1524 = vstv %s1523
        %v1525 = vmul.f32 %v1474, %v1524
        %v1526 = vmul.f32 %v1475, %v1524
        %1529 = vrot.lane.b32.xlu0 %v1525, 124
        %v1530 = vpop.permute.xlu0 %1529
        %1531 = vrot.lane.b32.xlu0 %v1526, 124
        %v1532 = vpop.permute.xlu0 %1531
        %v1535 = vadd.f32 %v1521, %v1530
        %v1536 = vadd.f32 %v1522, %v1532
        %s1537 = sld [smem:[#allocation8 + $0x60]]
        %v1538 = vstv %s1537
        %v1539 = vmul.f32 %v1474, %v1538
        %v1540 = vmul.f32 %v1475, %v1538
        %1543 = vrot.lane.b32.xlu0 %v1539, 123
        %v1544 = vpop.permute.xlu0 %1543
        %1545 = vrot.lane.b32.xlu0 %v1540, 123
        %v1546 = vpop.permute.xlu0 %1545
        %v1549 = vadd.f32 %v1535, %v1544
        %v1550 = vadd.f32 %v1536, %v1546
        %s1551 = sld [smem:[#allocation8 + $0x61]]
        %v1552 = vstv %s1551
        %v1553 = vmul.f32 %v1474, %v1552
        %v1554 = vmul.f32 %v1475, %v1552
        %1557 = vrot.lane.b32.xlu0 %v1553, 122
        %v1558 = vpop.permute.xlu0 %1557
        %1559 = vrot.lane.b32.xlu0 %v1554, 122
        %v1560 = vpop.permute.xlu0 %1559
        %v1563 = vadd.f32 %v1549, %v1558
        %v1564 = vadd.f32 %v1550, %v1560
        %v1565 = vsub.f32 0.0, %v1563
        %v1566 = vsub.f32 0.0, %v1564
        %v1567 = vmul.f32 %v1565, 1.442695
        %v1568 = vpow.pop %v1567
        %v1569 = vmul.f32 %v1566, 1.442695
        %v1570 = vpow.pop %v1569
        %v1571 = vadd.f32 %v1568, 1.0
        %v1572 = vadd.f32 %v1570, 1.0
        %v1573 = vrcp.pop %v1571
        %v1574 = vmul.f32 1.0, %v1573
        %v1575 = vrcp.pop %v1572
        %v1576 = vmul.f32 1.0, %v1575
        %1577 = vst.msk [vmem:[%s203] sm:$0xff] %vm212, %v1574
        %1578 = vst.msk [vmem:[%s203 + $0x8] sm:$0xff] %vm212, %v1576
        %s1579 = sand.u32 %s98, 1
        %s1580 = scalar_lea.sflag [#allocation6], %s1579
        %s1581 = sand.u32 %s98, 1
        %s1582 = smul.addr %s1581, 16
        %s1583 = scalar_lea.vmem [#allocation9], %s1582
        // Predicated region
        $region41: #{spatial_attention_forward.1} parent=31 // pred_check
          %p1584 = pneg %p108
        $region42: #{spatial_attention_forward.1} parent=31 // pred_check_branch
          %1586 = sbr.rel (%p1584) target = $region44
        $region43: #{spatial_attention_forward.1} parent=31 // pred_region
          %s1588 = ssub.s32 256, 256
          %1589 = vsyncadd %s1580, %s1588
          %s1590 = smul.addr %s22, 2
          %s1591 = smul.addr %s1590, 128
          %s1592 = scalar_lea.hbm %s3, %s1591
          %s1593 = sshll.u32 %s1583, 4
          %s1594 = int_to_ptr.vmem [resolvable:$true] %s1593
          %1599 = dma.vmem_to_hbm [thread:$0]  %s1594, 256, %s1592, %s1580, 128, 128, 8
        $region44: #{spatial_attention_forward.1} parent=31 // pred_fallthru
          _
      $region32: #{spatial_attention_forward.1} parent=5 // pred_fallthru
        _
      %p1600 = scmp.le.s32.totalorder 2, %s17
      // Predicated region
      $region45: #{spatial_attention_forward.1} parent=5 // pred_check
        %p1601 = pneg %p1600
      $region46: #{spatial_attention_forward.1} parent=5 // pred_check_branch
        %1603 = sbr.rel (%p1601) target = $region48
      $region47: #{spatial_attention_forward.1} parent=5 // pred_region
        %s1604 = ssub.s32 %s17, 2
        // Predicated region
        $region49: #{spatial_attention_forward.1} parent=47 // pred_check
          %p1605 = pneg %p114
        $region50: #{spatial_attention_forward.1} parent=47 // pred_check_branch
          %1607 = sbr.rel (%p1605) target = $region52
        $region51: #{spatial_attention_forward.1} parent=47 // pred_region
          %s1608 = sand.u32 %s99, 1
          %s1609 = scalar_lea.sflag [#allocation6], %s1608
          %s1610 = sand.u32 %s99, 1
          %s1611 = smul.addr %s1610, 16
          %s1612 = scalar_lea.vmem [#allocation9], %s1611
          %1613 = dma.done %s1609, 256
        $region52: #{spatial_attention_forward.1} parent=47 // pred_fallthru
          _
      $region48: #{spatial_attention_forward.1} parent=5 // pred_fallthru
        _
    $region6: #{spatial_attention_forward.1} parent=1 // loop_footer
      %s21 = sadd.s32 1, %s17
    $region7: #{spatial_attention_forward.1} parent=1 // loop_footer_branch
      %16 = sbr.rel target = $region3
    $region8: #{spatial_attention_forward.1} parent=1 // loop_exit
      _
    %1614 = vsyncpa [#allocation5], 1
    %s1615 = scalar_lea.sflag [#allocation5], 1
    %1616 = vsyncpa %s1615, 1
    %1617 = vsyncpa [#allocation6], 1
    %s1618 = scalar_lea.sflag [#allocation6], 1
    %1619 = vsyncpa %s1618, 1
    %1620 = vsyncpa [#allocation7], 1
    %s1621 = scalar_lea.sflag [#allocation7], 1
    %1622 = vsyncpa %s1621, 1

</llo_original>
